<compile_context>
chip_gen: v7x
topology: tpu7x:2x2x1
jax: 0.10.0
libtpu: 0.0.40
codegen_flags: <defaults>
</compile_context>

<pallas_src>
import numpy as np
import jax
import jax.numpy as jnp
from jax.experimental import pallas as pl
from jax.experimental.pallas import tpu as pltpu

EPS = 1e-5          # BatchNorm2d default eps
OUT_PAD = 128       # lane-dense padded output width of the last layer


# ------------------------------ fused Pallas kernel ------------------------------

def _make_kernel(B, N, F, J, n_atomic):
    """Single-invocation kernel: n_atomic gnn_atomic layers + gnn_last, fully unrolled."""
    half = F // 2
    conv_dims = (((2,), (0,)), ((), ()))       # (B,N,K)    x (K,O)   -> (B,N,O)
    gmul_dims = (((2,), (1,)), ((0,), (0,)))   # (B,J*N,M)  x (B,M,F) -> (B,J*N,F)
    inv_cnt = 1.0 / float(B * N)

    def kernel(Wm_ref, x0_ref, w_ref, aff_ref, wl_ref, bl_ref, o_ref):
        Wm = Wm_ref[...]                        # (B, J*N, N) bf16, VMEM-resident
        w_all = w_ref[...]                      # (L, J, F, F) bf16, resident
        aff = aff_ref[...]                      # (L, 3, F) f32: [bias, gamma, beta]
        wl = wl_ref[...]                        # (J, F, OUT_PAD) bf16
        bl = bl_ref[...]                        # (1, OUT_PAD) f32

        # Hoisted once (JAX does not CSE broadcast_in_dim across the unrolled loop).
        relu_mask = jax.lax.broadcasted_iota(jnp.int32, (1, 1, F), 2) < half

        def gmul(x_f32):
            # One batched matmul for all J graph operators.
            xg = jax.lax.dot_general(Wm, x_f32.astype(jnp.bfloat16),
                                     dimension_numbers=gmul_dims,
                                     preferred_element_type=jnp.float32)
            return xg.astype(jnp.bfloat16)      # (B, J*N, F)

        def conv(xg, w):
            # 1x1 conv over the J-stacked gmul output; w is (J, F, O).
            y = jax.lax.dot_general(xg[:, 0:N, :], w[0],
                                    dimension_numbers=conv_dims,
                                    preferred_element_type=jnp.float32)
            for j in range(1, J):
                y = y + jax.lax.dot_general(xg[:, j * N:(j + 1) * N, :], w[j],
                                            dimension_numbers=conv_dims,
                                            preferred_element_type=jnp.float32)
            return y                            # (B, N, O) f32

        x = x0_ref[...]                         # (B, N, F) f32, zero-padded channels

        # ------------------------- gnn_atomic layers -------------------------
        for i in range(n_atomic):
            xg = gmul(x)
            y = conv(xg, w_all[i]) + aff[i, 0:1, :]          # fused conv1|conv2 + bias

            # ReLU on the first F/2 lanes only (the conv1 branch).
            y = jnp.where(relu_mask, jnp.maximum(y, 0.0), y)

            # BatchNorm2d with batch statistics (single pass, clamped variance).
            s1 = jnp.sum(y, axis=(0, 1), keepdims=True)
            s2 = jnp.sum(y * y, axis=(0, 1), keepdims=True)
            mean = s1 * inv_cnt
            var = jnp.maximum(s2 * inv_cnt - mean * mean, 0.0)
            scale = jax.lax.rsqrt(var + EPS) * aff[i, 1:2, :]
            x = (y - mean) * scale + aff[i, 2:3, :]

        # ---------------------------- gnn_last -------------------------------
        xg = gmul(x)
        o_ref[...] = conv(xg, wl) + bl

    return kernel


# ------------------------------ parameter handling -------------------------------

def init_conv(key, c_in, c_out):
    # PyTorch Conv2d-style uniform(-1/sqrt(fan_in), 1/sqrt(fan_in)); weight stored
    # transposed as (C_in, C_out) so that row index = input channel j*C + c.
    k1, k2 = jax.random.split(key)
    bound = 1.0 / np.sqrt(c_in)
    w = jax.random.uniform(k1, (c_in, c_out), jnp.float32, -bound, bound)
    b = jax.random.uniform(k2, (1, c_out), jnp.float32, -bound, bound)
    return w, b


def init_gnn_params(key, num_features, num_layers, J, nclasses):
    params = []
    c_in = 1                                   # featuremap_beg = [1, num_features]
    half = num_features // 2
    for _ in range(num_layers + 1):
        key, k1, k2 = jax.random.split(key, 3)
        w1, b1 = init_conv(k1, c_in * J, half)
        w2, b2 = init_conv(k2, c_in * J, half)
        gamma = jnp.ones((1, num_features), jnp.float32)
        beta = jnp.zeros((1, num_features), jnp.float32)
        params.append(dict(w1=w1, b1=b1, w2=w2, b2=b2, gamma=gamma, beta=beta))
        c_in = num_features                    # featuremap_mid = [F, F]
    key, kl = jax.random.split(key)
    wl, bl = init_conv(kl, num_features * J, nclasses)
    params.append(dict(w=wl, b=bl))
    return params


def pack_params(params, J, F, nclasses):
    """Repack the torch-style per-layer params into the fused kernel layout."""
    atomic = params[:-1]
    L1 = len(atomic)                                        # num_layers + 1
    w_stack = np.zeros((L1, J, F, F), np.float32)
    aff = np.zeros((L1, 3, F), np.float32)                  # [bias, gamma, beta] per layer
    half = F // 2
    for i, p in enumerate(atomic):
        c_in = p['w1'].shape[0] // J
        # torch input-channel index = j*C_in + c  ->  reshape (J, C_in, half)
        w1 = np.asarray(p['w1']).reshape(J, c_in, half)
        w2 = np.asarray(p['w2']).reshape(J, c_in, half)
        w_stack[i, :, :c_in, :half] = w1                    # conv1 -> first F/2 lanes
        w_stack[i, :, :c_in, half:] = w2                    # conv2 -> last  F/2 lanes
        aff[i, 0, :half] = np.asarray(p['b1'])[0]
        aff[i, 0, half:] = np.asarray(p['b2'])[0]
        aff[i, 1] = np.asarray(p['gamma'])[0]
        aff[i, 2] = np.asarray(p['beta'])[0]
    pL = params[-1]
    wl = np.zeros((J, F, OUT_PAD), np.float32)
    wl[:, :, :nclasses] = np.asarray(pL['w']).reshape(J, F, nclasses)
    bl = np.zeros((1, OUT_PAD), np.float32)
    bl[0, :nclasses] = np.asarray(pL['b'])[0]
    return dict(
        w=jnp.asarray(w_stack, jnp.bfloat16),
        aff=jnp.asarray(aff, jnp.float32),
        wl=jnp.asarray(wl, jnp.bfloat16),
        bl=jnp.asarray(bl, jnp.float32),
    )


def pack_graph(W, J):
    """One-time host repack of the graph operators: (B, N, N, J) -> (B, J*N, N) bf16.

    Wm[b, j*N + n, m] = W[b, m, n, j], so one batched matmul Wm @ x computes all J
    graph propagations; xg[j] = Wm_x[:, j*N:(j+1)*N, :]. Done outside the per-call
    path so the transpose+cast over the largest tensor is not paid every forward.
    """
    Wnp = np.asarray(W)
    B, N, _, Jw = Wnp.shape
    assert Jw == J
    Wm = np.transpose(Wnp, (0, 3, 2, 1)).reshape(B, J * N, N)
    return jnp.asarray(Wm, jnp.bfloat16)


# ------------------------------------ forward ------------------------------------

def gnn_forward(packed, Wm, x, nclasses):
    # Wm: (B, J*N, N) bf16 (pre-packed graph operators); x: (B, N, 1) f32
    # (== torch (B, 1, N, 1)).
    B, JN, N = Wm.shape
    L1, J, F, _ = packed['w'].shape
    C0 = x.shape[2]
    x0 = jnp.pad(x, ((0, 0), (0, 0), (0, F - C0)))                  # zero-pad channels to F

    kernel = _make_kernel(B, N, F, J, L1)

    args = (Wm, x0, packed['w'], packed['aff'], packed['wl'], packed['bl'])
    total = sum(int(a.size) * a.dtype.itemsize for a in args)
    total += B * N * OUT_PAD * 4                                    # output block
    # Cap below v7x's 64 MiB physical VMEM; keep generous headroom for compiler scratch.
    vmem_limit = int(min(48 * 1024 * 1024, max(16 * 1024 * 1024, 4 * total)))

    # Single grid step: the whole layer loop runs inside one kernel invocation, so
    # there is no per-layer pipeline overhead and every operand is DMA'd exactly once.
    grid_spec = pltpu.PrefetchScalarGridSpec(
        num_scalar_prefetch=0,
        grid=(1,),
        in_specs=[
            pl.BlockSpec((B, JN, N), lambda l: (0, 0, 0)),          # merged graph operators
            pl.BlockSpec((B, N, F), lambda l: (0, 0, 0)),           # initial node signal
            pl.BlockSpec((L1, J, F, F), lambda l: (0, 0, 0, 0)),    # all conv weights
            pl.BlockSpec((L1, 3, F), lambda l: (0, 0, 0)),          # bias/gamma/beta stack
            pl.BlockSpec((J, F, OUT_PAD), lambda l: (0, 0, 0)),     # last conv weight
            pl.BlockSpec((1, OUT_PAD), lambda l: (0, 0)),           # last conv bias
        ],
        out_specs=pl.BlockSpec((B, N, OUT_PAD), lambda l: (0, 0, 0)),
    )

    out = pl.pallas_call(
        kernel,
        out_shape=jax.ShapeDtypeStruct((B, N, OUT_PAD), jnp.float32),
        grid_spec=grid_spec,
        compiler_params=pltpu.CompilerParams(
            dimension_semantics=("arbitrary",),
            vmem_limit_bytes=vmem_limit),
    )(*args)
    return out[:, :, :nclasses]


# ----------------------------------- reference ------------------------------------

def gnn_reference(params, W, x):
    """Pure-jnp reference with the original per-layer structure (separate conv1/conv2,
    lane concatenates, two-pass BN). Matmul operands are cast to bfloat16 with float32
    accumulation to mirror the kernel's MXU input precision; BN math is float32."""
    Wk = jnp.transpose(W, (0, 3, 1, 2))                              # (B, J, N, N)

    def bdot(a, b, dims):
        return jax.lax.dot_general(a.astype(jnp.bfloat16), b.astype(jnp.bfloat16),
                                   dimension_numbers=dims,
                                   preferred_element_type=jnp.float32)

    def gmul(x):
        # output channel order j*C + c, matching torch.cat(split(...), 1)
        return jnp.concatenate(
            [bdot(Wk[:, j], x, (((1,), (1,)), ((0,), (0,)))) for j in range(Wk.shape[1])],
            axis=-1)

    cdims = (((2,), (0,)), ((), ()))
    for p in params[:-1]:
        xg = gmul(x)
        y1 = jnp.maximum(bdot(xg, p['w1'], cdims) + p['b1'][None], 0.0)
        y2 = bdot(xg, p['w2'], cdims) + p['b2'][None]
        xc = jnp.concatenate([y1, y2], axis=-1)
        mean = xc.mean(axis=(0, 1), keepdims=True)
        var = ((xc - mean) ** 2).mean(axis=(0, 1), keepdims=True)
        x = (xc - mean) / jnp.sqrt(var + EPS) * p['gamma'][None] + p['beta'][None]
    pL = params[-1]
    return bdot(gmul(x), pL['w'], cdims) + pL['b'][None]


# ------------------------------------- main ---------------------------------------

if __name__ == "__main__":
    key = jax.random.PRNGKey(0)
    B, N, J = 2, 16, 2
    num_features, num_layers, nclasses = 32, 2, 3

    k_w, k_x, k_p = jax.random.split(key, 3)
    # Graph-operator family (e.g. powers of adjacency), kept well-conditioned.
    W = jax.random.uniform(k_w, (B, N, N, J), jnp.float32, 0.0, 1.0) / N
    # Initial node signal: torch shape (B, 1, N, 1) -> our layout (B, N, 1).
    x = jax.random.normal(k_x, (B, N, 1), jnp.float32)

    params = init_gnn_params(k_p, num_features, num_layers, J, nclasses)
    packed = pack_params(params, J, num_features, nclasses)
    Wm = pack_graph(W, J)                      # one-time repack of the graph operators

    out = jax.block_until_ready(gnn_forward(packed, Wm, x, nclasses))
    assert out.shape == (B, N, nclasses)

    ref = jax.block_until_ready(gnn_reference(params, W, x))
    np.testing.assert_allclose(np.asarray(out), np.asarray(ref), rtol=2e-2, atol=2e-2)
    print("KERNEL_OK")
</pallas_src>

<mosaic_0001>
module attributes {stable_mosaic.version = 11 : i64} {
  func.func @kernel(%arg0: i32, %arg1: memref<2x32x16xbf16, #tpu.memory_space<vmem>>, %arg2: memref<2x16x32xf32, #tpu.memory_space<vmem>>, %arg3: memref<3x2x32x32xbf16, #tpu.memory_space<vmem>>, %arg4: memref<3x3x32xf32, #tpu.memory_space<vmem>>, %arg5: memref<2x32x128xbf16, #tpu.memory_space<vmem>>, %arg6: memref<1x128xf32, #tpu.memory_space<vmem>>, %arg7: memref<2x16x128xf32, #tpu.memory_space<vmem>>) attributes {dimension_semantics = [#tpu.dimension_semantics<arbitrary>], iteration_bounds = array<i64: 1>, scalar_prefetch = 0 : i64, scratch_operands = 0 : i64, tpu.core_type = #tpu.core_type<tc>, window_params = [{pipeline_mode = #tpu.pipeline_mode<synchronous>, transform_indices = @transform_0, window_bounds = array<i64: 2, 32, 16>}, {pipeline_mode = #tpu.pipeline_mode<synchronous>, transform_indices = @transform_1, window_bounds = array<i64: 2, 16, 32>}, {pipeline_mode = #tpu.pipeline_mode<synchronous>, transform_indices = @transform_2, window_bounds = array<i64: 3, 2, 32, 32>}, {pipeline_mode = #tpu.pipeline_mode<synchronous>, transform_indices = @transform_3, window_bounds = array<i64: 3, 3, 32>}, {pipeline_mode = #tpu.pipeline_mode<synchronous>, transform_indices = @transform_4, window_bounds = array<i64: 2, 32, 128>}, {pipeline_mode = #tpu.pipeline_mode<synchronous>, transform_indices = @transform_5, window_bounds = array<i64: 1, 128>}, {pipeline_mode = #tpu.pipeline_mode<synchronous>, transform_indices = @transform_6, window_bounds = array<i64: 2, 16, 128>}]} {
    %c0 = arith.constant 0 : index
    %c0_0 = arith.constant 0 : index
    %c0_1 = arith.constant 0 : index
    %0 = vector.load %arg1[%c0, %c0_0, %c0_1] : memref<2x32x16xbf16, #tpu.memory_space<vmem>>, vector<2x32x16xbf16>
    %c0_2 = arith.constant 0 : index
    %c0_3 = arith.constant 0 : index
    %c0_4 = arith.constant 0 : index
    %c0_5 = arith.constant 0 : index
    %1 = vector.load %arg3[%c0_2, %c0_3, %c0_4, %c0_5] : memref<3x2x32x32xbf16, #tpu.memory_space<vmem>>, vector<3x2x32x32xbf16>
    %c0_6 = arith.constant 0 : index
    %c0_7 = arith.constant 0 : index
    %c0_8 = arith.constant 0 : index
    %2 = vector.load %arg4[%c0_6, %c0_7, %c0_8] : memref<3x3x32xf32, #tpu.memory_space<vmem>>, vector<3x3x32xf32>
    %c0_9 = arith.constant 0 : index
    %c0_10 = arith.constant 0 : index
    %c0_11 = arith.constant 0 : index
    %3 = vector.load %arg5[%c0_9, %c0_10, %c0_11] : memref<2x32x128xbf16, #tpu.memory_space<vmem>>, vector<2x32x128xbf16>
    %c0_12 = arith.constant 0 : index
    %c0_13 = arith.constant 0 : index
    %4 = vector.load %arg6[%c0_12, %c0_13] : memref<1x128xf32, #tpu.memory_space<vmem>>, vector<1x128xf32>
    %5 = tpu.iota {dimensions = array<i32: 2>} : vector<1x1x32xi32>
    %c16_i32 = arith.constant 16 : i32
    %6 = vector.broadcast %c16_i32 : i32 to vector<1x1x32xi32>
    %7 = arith.cmpi slt, %5, %6 : vector<1x1x32xi32>
    %c0_14 = arith.constant 0 : index
    %c0_15 = arith.constant 0 : index
    %c0_16 = arith.constant 0 : index
    %8 = vector.load %arg2[%c0_14, %c0_15, %c0_16] : memref<2x16x32xf32, #tpu.memory_space<vmem>>, vector<2x16x32xf32>
    %9 = arith.truncf %8 : vector<2x16x32xf32> to vector<2x16x32xbf16>
    %cst = arith.constant dense<0.000000e+00> : vector<2x32x32xf32>
    %10 = tpu.matmul %0, %9, %cst {dimension_numbers = #tpu.dot_dimension_numbers<[2], [1], [1], [2], [0, 0, 0, 1, 1, 2], [0], [0]>} : vector<2x32x16xbf16>, vector<2x16x32xbf16>, vector<2x32x32xf32> -> vector<2x32x32xf32>
    %11 = arith.truncf %10 : vector<2x32x32xf32> to vector<2x32x32xbf16>
    %12 = vector.extract_strided_slice %1 {offsets = [0, 0, 0, 0], sizes = [1, 2, 32, 32], strides = [1, 1, 1, 1]} : vector<3x2x32x32xbf16> to vector<1x2x32x32xbf16>
    %13 = vector.shape_cast %12 : vector<1x2x32x32xbf16> to vector<2x32x32xbf16>
    %14 = vector.extract_strided_slice %11 {offsets = [0, 0, 0], sizes = [2, 16, 32], strides = [1, 1, 1]} : vector<2x32x32xbf16> to vector<2x16x32xbf16>
    %15 = vector.extract_strided_slice %13 {offsets = [0, 0, 0], sizes = [1, 32, 32], strides = [1, 1, 1]} : vector<2x32x32xbf16> to vector<1x32x32xbf16>
    %16 = vector.shape_cast %15 : vector<1x32x32xbf16> to vector<32x32xbf16>
    %cst_17 = arith.constant dense<0.000000e+00> : vector<2x16x32xf32>
    %17 = tpu.matmul %14, %16, %cst_17 {dimension_numbers = #tpu.dot_dimension_numbers<[2], [0], [0, 1], [1], [0, 0, 0, 1, 1, 1], [], []>} : vector<2x16x32xbf16>, vector<32x32xbf16>, vector<2x16x32xf32> -> vector<2x16x32xf32>
    %18 = vector.extract_strided_slice %11 {offsets = [0, 16, 0], sizes = [2, 16, 32], strides = [1, 1, 1]} : vector<2x32x32xbf16> to vector<2x16x32xbf16>
    %19 = vector.extract_strided_slice %13 {offsets = [1, 0, 0], sizes = [1, 32, 32], strides = [1, 1, 1]} : vector<2x32x32xbf16> to vector<1x32x32xbf16>
    %20 = vector.shape_cast %19 : vector<1x32x32xbf16> to vector<32x32xbf16>
    %cst_18 = arith.constant dense<0.000000e+00> : vector<2x16x32xf32>
    %21 = tpu.matmul %18, %20, %cst_18 {dimension_numbers = #tpu.dot_dimension_numbers<[2], [0], [0, 1], [1], [0, 0, 0, 1, 1, 1], [], []>} : vector<2x16x32xbf16>, vector<32x32xbf16>, vector<2x16x32xf32> -> vector<2x16x32xf32>
    %22 = arith.addf %17, %21 : vector<2x16x32xf32>
    %23 = vector.extract_strided_slice %2 {offsets = [0, 0, 0], sizes = [1, 1, 32], strides = [1, 1, 1]} : vector<3x3x32xf32> to vector<1x1x32xf32>
    %24 = vector.shape_cast %23 : vector<1x1x32xf32> to vector<1x32xf32>
    %25 = vector.shape_cast %24 : vector<1x32xf32> to vector<1x1x32xf32>
    %26 = vector.broadcast %25 : vector<1x1x32xf32> to vector<2x16x32xf32>
    %27 = arith.addf %22, %26 : vector<2x16x32xf32>
    %cst_19 = arith.constant 0.000000e+00 : f32
    %28 = vector.broadcast %cst_19 : f32 to vector<2x16x32xf32>
    %29 = arith.maximumf %27, %28 : vector<2x16x32xf32>
    %30 = vector.shape_cast %7 : vector<1x1x32xi1> to vector<1x1x32xi1>
    %31 = vector.broadcast %30 : vector<1x1x32xi1> to vector<2x16x32xi1>
    %32 = arith.select %31, %29, %27 : vector<2x16x32xi1>, vector<2x16x32xf32>
    %cst_20 = arith.constant dense<0.000000e+00> : vector<32xf32>
    %33 = vector.multi_reduction <add>, %32, %cst_20 [0, 1] : vector<2x16x32xf32> to vector<32xf32>
    %34 = vector.shape_cast %33 : vector<32xf32> to vector<1x1x32xf32>
    %35 = arith.mulf %32, %32 : vector<2x16x32xf32>
    %cst_21 = arith.constant dense<0.000000e+00> : vector<32xf32>
    %36 = vector.multi_reduction <add>, %35, %cst_21 [0, 1] : vector<2x16x32xf32> to vector<32xf32>
    %37 = vector.shape_cast %36 : vector<32xf32> to vector<1x1x32xf32>
    %cst_22 = arith.constant 3.125000e-02 : f32
    %38 = vector.broadcast %cst_22 : f32 to vector<1x1x32xf32>
    %39 = arith.mulf %34, %38 : vector<1x1x32xf32>
    %cst_23 = arith.constant 3.125000e-02 : f32
    %40 = vector.broadcast %cst_23 : f32 to vector<1x1x32xf32>
    %41 = arith.mulf %37, %40 : vector<1x1x32xf32>
    %42 = arith.mulf %39, %39 : vector<1x1x32xf32>
    %43 = arith.subf %41, %42 : vector<1x1x32xf32>
    %cst_24 = arith.constant 0.000000e+00 : f32
    %44 = vector.broadcast %cst_24 : f32 to vector<1x1x32xf32>
    %45 = arith.maximumf %43, %44 : vector<1x1x32xf32>
    %cst_25 = arith.constant 9.99999974E-6 : f32
    %46 = vector.broadcast %cst_25 : f32 to vector<1x1x32xf32>
    %47 = arith.addf %45, %46 : vector<1x1x32xf32>
    %48 = math.rsqrt %47 : vector<1x1x32xf32>
    %49 = vector.extract_strided_slice %2 {offsets = [0, 1, 0], sizes = [1, 1, 32], strides = [1, 1, 1]} : vector<3x3x32xf32> to vector<1x1x32xf32>
    %50 = vector.shape_cast %49 : vector<1x1x32xf32> to vector<1x32xf32>
    %51 = vector.shape_cast %50 : vector<1x32xf32> to vector<1x1x32xf32>
    %52 = arith.mulf %48, %51 : vector<1x1x32xf32>
    %53 = vector.broadcast %39 : vector<1x1x32xf32> to vector<2x16x32xf32>
    %54 = arith.subf %32, %53 : vector<2x16x32xf32>
    %55 = vector.broadcast %52 : vector<1x1x32xf32> to vector<2x16x32xf32>
    %56 = arith.mulf %54, %55 : vector<2x16x32xf32>
    %57 = vector.extract_strided_slice %2 {offsets = [0, 2, 0], sizes = [1, 1, 32], strides = [1, 1, 1]} : vector<3x3x32xf32> to vector<1x1x32xf32>
    %58 = vector.shape_cast %57 : vector<1x1x32xf32> to vector<1x32xf32>
    %59 = vector.shape_cast %58 : vector<1x32xf32> to vector<1x1x32xf32>
    %60 = vector.broadcast %59 : vector<1x1x32xf32> to vector<2x16x32xf32>
    %61 = arith.addf %56, %60 : vector<2x16x32xf32>
    %62 = arith.truncf %61 : vector<2x16x32xf32> to vector<2x16x32xbf16>
    %cst_26 = arith.constant dense<0.000000e+00> : vector<2x32x32xf32>
    %63 = tpu.matmul %0, %62, %cst_26 {dimension_numbers = #tpu.dot_dimension_numbers<[2], [1], [1], [2], [0, 0, 0, 1, 1, 2], [0], [0]>} : vector<2x32x16xbf16>, vector<2x16x32xbf16>, vector<2x32x32xf32> -> vector<2x32x32xf32>
    %64 = arith.truncf %63 : vector<2x32x32xf32> to vector<2x32x32xbf16>
    %65 = vector.extract_strided_slice %1 {offsets = [1, 0, 0, 0], sizes = [1, 2, 32, 32], strides = [1, 1, 1, 1]} : vector<3x2x32x32xbf16> to vector<1x2x32x32xbf16>
    %66 = vector.shape_cast %65 : vector<1x2x32x32xbf16> to vector<2x32x32xbf16>
    %67 = vector.extract_strided_slice %64 {offsets = [0, 0, 0], sizes = [2, 16, 32], strides = [1, 1, 1]} : vector<2x32x32xbf16> to vector<2x16x32xbf16>
    %68 = vector.extract_strided_slice %66 {offsets = [0, 0, 0], sizes = [1, 32, 32], strides = [1, 1, 1]} : vector<2x32x32xbf16> to vector<1x32x32xbf16>
    %69 = vector.shape_cast %68 : vector<1x32x32xbf16> to vector<32x32xbf16>
    %cst_27 = arith.constant dense<0.000000e+00> : vector<2x16x32xf32>
    %70 = tpu.matmul %67, %69, %cst_27 {dimension_numbers = #tpu.dot_dimension_numbers<[2], [0], [0, 1], [1], [0, 0, 0, 1, 1, 1], [], []>} : vector<2x16x32xbf16>, vector<32x32xbf16>, vector<2x16x32xf32> -> vector<2x16x32xf32>
    %71 = vector.extract_strided_slice %64 {offsets = [0, 16, 0], sizes = [2, 16, 32], strides = [1, 1, 1]} : vector<2x32x32xbf16> to vector<2x16x32xbf16>
    %72 = vector.extract_strided_slice %66 {offsets = [1, 0, 0], sizes = [1, 32, 32], strides = [1, 1, 1]} : vector<2x32x32xbf16> to vector<1x32x32xbf16>
    %73 = vector.shape_cast %72 : vector<1x32x32xbf16> to vector<32x32xbf16>
    %cst_28 = arith.constant dense<0.000000e+00> : vector<2x16x32xf32>
    %74 = tpu.matmul %71, %73, %cst_28 {dimension_numbers = #tpu.dot_dimension_numbers<[2], [0], [0, 1], [1], [0, 0, 0, 1, 1, 1], [], []>} : vector<2x16x32xbf16>, vector<32x32xbf16>, vector<2x16x32xf32> -> vector<2x16x32xf32>
    %75 = arith.addf %70, %74 : vector<2x16x32xf32>
    %76 = vector.extract_strided_slice %2 {offsets = [1, 0, 0], sizes = [1, 1, 32], strides = [1, 1, 1]} : vector<3x3x32xf32> to vector<1x1x32xf32>
    %77 = vector.shape_cast %76 : vector<1x1x32xf32> to vector<1x32xf32>
    %78 = vector.shape_cast %77 : vector<1x32xf32> to vector<1x1x32xf32>
    %79 = vector.broadcast %78 : vector<1x1x32xf32> to vector<2x16x32xf32>
    %80 = arith.addf %75, %79 : vector<2x16x32xf32>
    %cst_29 = arith.constant 0.000000e+00 : f32
    %81 = vector.broadcast %cst_29 : f32 to vector<2x16x32xf32>
    %82 = arith.maximumf %80, %81 : vector<2x16x32xf32>
    %83 = vector.shape_cast %7 : vector<1x1x32xi1> to vector<1x1x32xi1>
    %84 = vector.broadcast %83 : vector<1x1x32xi1> to vector<2x16x32xi1>
    %85 = arith.select %84, %82, %80 : vector<2x16x32xi1>, vector<2x16x32xf32>
    %cst_30 = arith.constant dense<0.000000e+00> : vector<32xf32>
    %86 = vector.multi_reduction <add>, %85, %cst_30 [0, 1] : vector<2x16x32xf32> to vector<32xf32>
    %87 = vector.shape_cast %86 : vector<32xf32> to vector<1x1x32xf32>
    %88 = arith.mulf %85, %85 : vector<2x16x32xf32>
    %cst_31 = arith.constant dense<0.000000e+00> : vector<32xf32>
    %89 = vector.multi_reduction <add>, %88, %cst_31 [0, 1] : vector<2x16x32xf32> to vector<32xf32>
    %90 = vector.shape_cast %89 : vector<32xf32> to vector<1x1x32xf32>
    %cst_32 = arith.constant 3.125000e-02 : f32
    %91 = vector.broadcast %cst_32 : f32 to vector<1x1x32xf32>
    %92 = arith.mulf %87, %91 : vector<1x1x32xf32>
    %cst_33 = arith.constant 3.125000e-02 : f32
    %93 = vector.broadcast %cst_33 : f32 to vector<1x1x32xf32>
    %94 = arith.mulf %90, %93 : vector<1x1x32xf32>
    %95 = arith.mulf %92, %92 : vector<1x1x32xf32>
    %96 = arith.subf %94, %95 : vector<1x1x32xf32>
    %cst_34 = arith.constant 0.000000e+00 : f32
    %97 = vector.broadcast %cst_34 : f32 to vector<1x1x32xf32>
    %98 = arith.maximumf %96, %97 : vector<1x1x32xf32>
    %cst_35 = arith.constant 9.99999974E-6 : f32
    %99 = vector.broadcast %cst_35 : f32 to vector<1x1x32xf32>
    %100 = arith.addf %98, %99 : vector<1x1x32xf32>
    %101 = math.rsqrt %100 : vector<1x1x32xf32>
    %102 = vector.extract_strided_slice %2 {offsets = [1, 1, 0], sizes = [1, 1, 32], strides = [1, 1, 1]} : vector<3x3x32xf32> to vector<1x1x32xf32>
    %103 = vector.shape_cast %102 : vector<1x1x32xf32> to vector<1x32xf32>
    %104 = vector.shape_cast %103 : vector<1x32xf32> to vector<1x1x32xf32>
    %105 = arith.mulf %101, %104 : vector<1x1x32xf32>
    %106 = vector.broadcast %92 : vector<1x1x32xf32> to vector<2x16x32xf32>
    %107 = arith.subf %85, %106 : vector<2x16x32xf32>
    %108 = vector.broadcast %105 : vector<1x1x32xf32> to vector<2x16x32xf32>
    %109 = arith.mulf %107, %108 : vector<2x16x32xf32>
    %110 = vector.extract_strided_slice %2 {offsets = [1, 2, 0], sizes = [1, 1, 32], strides = [1, 1, 1]} : vector<3x3x32xf32> to vector<1x1x32xf32>
    %111 = vector.shape_cast %110 : vector<1x1x32xf32> to vector<1x32xf32>
    %112 = vector.shape_cast %111 : vector<1x32xf32> to vector<1x1x32xf32>
    %113 = vector.broadcast %112 : vector<1x1x32xf32> to vector<2x16x32xf32>
    %114 = arith.addf %109, %113 : vector<2x16x32xf32>
    %115 = arith.truncf %114 : vector<2x16x32xf32> to vector<2x16x32xbf16>
    %cst_36 = arith.constant dense<0.000000e+00> : vector<2x32x32xf32>
    %116 = tpu.matmul %0, %115, %cst_36 {dimension_numbers = #tpu.dot_dimension_numbers<[2], [1], [1], [2], [0, 0, 0, 1, 1, 2], [0], [0]>} : vector<2x32x16xbf16>, vector<2x16x32xbf16>, vector<2x32x32xf32> -> vector<2x32x32xf32>
    %117 = arith.truncf %116 : vector<2x32x32xf32> to vector<2x32x32xbf16>
    %118 = vector.extract_strided_slice %1 {offsets = [2, 0, 0, 0], sizes = [1, 2, 32, 32], strides = [1, 1, 1, 1]} : vector<3x2x32x32xbf16> to vector<1x2x32x32xbf16>
    %119 = vector.shape_cast %118 : vector<1x2x32x32xbf16> to vector<2x32x32xbf16>
    %120 = vector.extract_strided_slice %117 {offsets = [0, 0, 0], sizes = [2, 16, 32], strides = [1, 1, 1]} : vector<2x32x32xbf16> to vector<2x16x32xbf16>
    %121 = vector.extract_strided_slice %119 {offsets = [0, 0, 0], sizes = [1, 32, 32], strides = [1, 1, 1]} : vector<2x32x32xbf16> to vector<1x32x32xbf16>
    %122 = vector.shape_cast %121 : vector<1x32x32xbf16> to vector<32x32xbf16>
    %cst_37 = arith.constant dense<0.000000e+00> : vector<2x16x32xf32>
    %123 = tpu.matmul %120, %122, %cst_37 {dimension_numbers = #tpu.dot_dimension_numbers<[2], [0], [0, 1], [1], [0, 0, 0, 1, 1, 1], [], []>} : vector<2x16x32xbf16>, vector<32x32xbf16>, vector<2x16x32xf32> -> vector<2x16x32xf32>
    %124 = vector.extract_strided_slice %117 {offsets = [0, 16, 0], sizes = [2, 16, 32], strides = [1, 1, 1]} : vector<2x32x32xbf16> to vector<2x16x32xbf16>
    %125 = vector.extract_strided_slice %119 {offsets = [1, 0, 0], sizes = [1, 32, 32], strides = [1, 1, 1]} : vector<2x32x32xbf16> to vector<1x32x32xbf16>
    %126 = vector.shape_cast %125 : vector<1x32x32xbf16> to vector<32x32xbf16>
    %cst_38 = arith.constant dense<0.000000e+00> : vector<2x16x32xf32>
    %127 = tpu.matmul %124, %126, %cst_38 {dimension_numbers = #tpu.dot_dimension_numbers<[2], [0], [0, 1], [1], [0, 0, 0, 1, 1, 1], [], []>} : vector<2x16x32xbf16>, vector<32x32xbf16>, vector<2x16x32xf32> -> vector<2x16x32xf32>
    %128 = arith.addf %123, %127 : vector<2x16x32xf32>
    %129 = vector.extract_strided_slice %2 {offsets = [2, 0, 0], sizes = [1, 1, 32], strides = [1, 1, 1]} : vector<3x3x32xf32> to vector<1x1x32xf32>
    %130 = vector.shape_cast %129 : vector<1x1x32xf32> to vector<1x32xf32>
    %131 = vector.shape_cast %130 : vector<1x32xf32> to vector<1x1x32xf32>
    %132 = vector.broadcast %131 : vector<1x1x32xf32> to vector<2x16x32xf32>
    %133 = arith.addf %128, %132 : vector<2x16x32xf32>
    %cst_39 = arith.constant 0.000000e+00 : f32
    %134 = vector.broadcast %cst_39 : f32 to vector<2x16x32xf32>
    %135 = arith.maximumf %133, %134 : vector<2x16x32xf32>
    %136 = vector.shape_cast %7 : vector<1x1x32xi1> to vector<1x1x32xi1>
    %137 = vector.broadcast %136 : vector<1x1x32xi1> to vector<2x16x32xi1>
    %138 = arith.select %137, %135, %133 : vector<2x16x32xi1>, vector<2x16x32xf32>
    %cst_40 = arith.constant dense<0.000000e+00> : vector<32xf32>
    %139 = vector.multi_reduction <add>, %138, %cst_40 [0, 1] : vector<2x16x32xf32> to vector<32xf32>
    %140 = vector.shape_cast %139 : vector<32xf32> to vector<1x1x32xf32>
    %141 = arith.mulf %138, %138 : vector<2x16x32xf32>
    %cst_41 = arith.constant dense<0.000000e+00> : vector<32xf32>
    %142 = vector.multi_reduction <add>, %141, %cst_41 [0, 1] : vector<2x16x32xf32> to vector<32xf32>
    %143 = vector.shape_cast %142 : vector<32xf32> to vector<1x1x32xf32>
    %cst_42 = arith.constant 3.125000e-02 : f32
    %144 = vector.broadcast %cst_42 : f32 to vector<1x1x32xf32>
    %145 = arith.mulf %140, %144 : vector<1x1x32xf32>
    %cst_43 = arith.constant 3.125000e-02 : f32
    %146 = vector.broadcast %cst_43 : f32 to vector<1x1x32xf32>
    %147 = arith.mulf %143, %146 : vector<1x1x32xf32>
    %148 = arith.mulf %145, %145 : vector<1x1x32xf32>
    %149 = arith.subf %147, %148 : vector<1x1x32xf32>
    %cst_44 = arith.constant 0.000000e+00 : f32
    %150 = vector.broadcast %cst_44 : f32 to vector<1x1x32xf32>
    %151 = arith.maximumf %149, %150 : vector<1x1x32xf32>
    %cst_45 = arith.constant 9.99999974E-6 : f32
    %152 = vector.broadcast %cst_45 : f32 to vector<1x1x32xf32>
    %153 = arith.addf %151, %152 : vector<1x1x32xf32>
    %154 = math.rsqrt %153 : vector<1x1x32xf32>
    %155 = vector.extract_strided_slice %2 {offsets = [2, 1, 0], sizes = [1, 1, 32], strides = [1, 1, 1]} : vector<3x3x32xf32> to vector<1x1x32xf32>
    %156 = vector.shape_cast %155 : vector<1x1x32xf32> to vector<1x32xf32>
    %157 = vector.shape_cast %156 : vector<1x32xf32> to vector<1x1x32xf32>
    %158 = arith.mulf %154, %157 : vector<1x1x32xf32>
    %159 = vector.broadcast %145 : vector<1x1x32xf32> to vector<2x16x32xf32>
    %160 = arith.subf %138, %159 : vector<2x16x32xf32>
    %161 = vector.broadcast %158 : vector<1x1x32xf32> to vector<2x16x32xf32>
    %162 = arith.mulf %160, %161 : vector<2x16x32xf32>
    %163 = vector.extract_strided_slice %2 {offsets = [2, 2, 0], sizes = [1, 1, 32], strides = [1, 1, 1]} : vector<3x3x32xf32> to vector<1x1x32xf32>
    %164 = vector.shape_cast %163 : vector<1x1x32xf32> to vector<1x32xf32>
    %165 = vector.shape_cast %164 : vector<1x32xf32> to vector<1x1x32xf32>
    %166 = vector.broadcast %165 : vector<1x1x32xf32> to vector<2x16x32xf32>
    %167 = arith.addf %162, %166 : vector<2x16x32xf32>
    %168 = arith.truncf %167 : vector<2x16x32xf32> to vector<2x16x32xbf16>
    %cst_46 = arith.constant dense<0.000000e+00> : vector<2x32x32xf32>
    %169 = tpu.matmul %0, %168, %cst_46 {dimension_numbers = #tpu.dot_dimension_numbers<[2], [1], [1], [2], [0, 0, 0, 1, 1, 2], [0], [0]>} : vector<2x32x16xbf16>, vector<2x16x32xbf16>, vector<2x32x32xf32> -> vector<2x32x32xf32>
    %170 = arith.truncf %169 : vector<2x32x32xf32> to vector<2x32x32xbf16>
    %171 = vector.extract_strided_slice %170 {offsets = [0, 0, 0], sizes = [2, 16, 32], strides = [1, 1, 1]} : vector<2x32x32xbf16> to vector<2x16x32xbf16>
    %172 = vector.extract_strided_slice %3 {offsets = [0, 0, 0], sizes = [1, 32, 128], strides = [1, 1, 1]} : vector<2x32x128xbf16> to vector<1x32x128xbf16>
    %173 = vector.shape_cast %172 : vector<1x32x128xbf16> to vector<32x128xbf16>
    %cst_47 = arith.constant dense<0.000000e+00> : vector<2x16x128xf32>
    %174 = tpu.matmul %171, %173, %cst_47 {dimension_numbers = #tpu.dot_dimension_numbers<[2], [0], [0, 1], [1], [0, 0, 0, 1, 1, 1], [], []>} : vector<2x16x32xbf16>, vector<32x128xbf16>, vector<2x16x128xf32> -> vector<2x16x128xf32>
    %175 = vector.extract_strided_slice %170 {offsets = [0, 16, 0], sizes = [2, 16, 32], strides = [1, 1, 1]} : vector<2x32x32xbf16> to vector<2x16x32xbf16>
    %176 = vector.extract_strided_slice %3 {offsets = [1, 0, 0], sizes = [1, 32, 128], strides = [1, 1, 1]} : vector<2x32x128xbf16> to vector<1x32x128xbf16>
    %177 = vector.shape_cast %176 : vector<1x32x128xbf16> to vector<32x128xbf16>
    %cst_48 = arith.constant dense<0.000000e+00> : vector<2x16x128xf32>
    %178 = tpu.matmul %175, %177, %cst_48 {dimension_numbers = #tpu.dot_dimension_numbers<[2], [0], [0, 1], [1], [0, 0, 0, 1, 1, 1], [], []>} : vector<2x16x32xbf16>, vector<32x128xbf16>, vector<2x16x128xf32> -> vector<2x16x128xf32>
    %179 = arith.addf %174, %178 : vector<2x16x128xf32>
    %180 = vector.shape_cast %4 : vector<1x128xf32> to vector<1x1x128xf32>
    %181 = vector.broadcast %180 : vector<1x1x128xf32> to vector<2x16x128xf32>
    %182 = arith.addf %179, %181 : vector<2x16x128xf32>
    %c0_49 = arith.constant 0 : index
    %c0_50 = arith.constant 0 : index
    %c0_51 = arith.constant 0 : index
    %183 = vector.load %arg7[%c0_49, %c0_50, %c0_51] : memref<2x16x128xf32, #tpu.memory_space<vmem>>, vector<2x16x128xf32>
    tpu.vector_store %arg7[%c0_49, %c0_50, %c0_51], %182 {strides = array<i32>} : memref<2x16x128xf32, #tpu.memory_space<vmem>>, vector<2x16x128xf32>,
    return
  }
  func.func @transform_0(%arg0: i32) -> (i32, i32, i32) {
    %c0_i32 = arith.constant 0 : i32
    %c0_i32_0 = arith.constant 0 : i32
    %c0_i32_1 = arith.constant 0 : i32
    %c0_i32_2 = arith.constant 0 : i32
    return %c0_i32, %c0_i32_0, %c0_i32_1 : i32, i32, i32
  }
  func.func @transform_1(%arg0: i32) -> (i32, i32, i32) {
    %c0_i32 = arith.constant 0 : i32
    %c0_i32_0 = arith.constant 0 : i32
    %c0_i32_1 = arith.constant 0 : i32
    %c0_i32_2 = arith.constant 0 : i32
    return %c0_i32, %c0_i32_0, %c0_i32_1 : i32, i32, i32
  }
  func.func @transform_2(%arg0: i32) -> (i32, i32, i32, i32) {
    %c0_i32 = arith.constant 0 : i32
    %c0_i32_0 = arith.constant 0 : i32
    %c0_i32_1 = arith.constant 0 : i32
    %c0_i32_2 = arith.constant 0 : i32
    %c0_i32_3 = arith.constant 0 : i32
    return %c0_i32, %c0_i32_0, %c0_i32_1, %c0_i32_2 : i32, i32, i32, i32
  }
  func.func @transform_3(%arg0: i32) -> (i32, i32, i32) {
    %c0_i32 = arith.constant 0 : i32
    %c0_i32_0 = arith.constant 0 : i32
    %c0_i32_1 = arith.constant 0 : i32
    %c0_i32_2 = arith.constant 0 : i32
    return %c0_i32, %c0_i32_0, %c0_i32_1 : i32, i32, i32
  }
  func.func @transform_4(%arg0: i32) -> (i32, i32, i32) {
    %c0_i32 = arith.constant 0 : i32
    %c0_i32_0 = arith.constant 0 : i32
    %c0_i32_1 = arith.constant 0 : i32
    %c0_i32_2 = arith.constant 0 : i32
    return %c0_i32, %c0_i32_0, %c0_i32_1 : i32, i32, i32
  }
  func.func @transform_5(%arg0: i32) -> (i32, i32) {
    %c0_i32 = arith.constant 0 : i32
    %c0_i32_0 = arith.constant 0 : i32
    %c0_i32_1 = arith.constant 0 : i32
    return %c0_i32, %c0_i32_0 : i32, i32
  }
  func.func @transform_6(%arg0: i32) -> (i32, i32, i32) {
    %c0_i32 = arith.constant 0 : i32
    %c0_i32_0 = arith.constant 0 : i32
    %c0_i32_1 = arith.constant 0 : i32
    %c0_i32_2 = arith.constant 0 : i32
    return %c0_i32, %c0_i32_0, %c0_i32_1 : i32, i32, i32
  }
}

</mosaic_0001>

<llo_original>
// kernel: tpu_custom_call.1
$region0: #{tpu_custom_call.1}
  #allocation0 [shape = 'u32[]', space=smem, size = 0x4, offset = 0x4, fixed_abs, tag = 'smem constant byte address 0x4 - core index']
  #allocation1 [shape = 'u32[144,128]{1,0:T(1,128)}', space=vmem, size = 0x12000, scoped, tag = 'internal scratch']
  %s0 = inlined_call_operand.vmem [shape: bf16[2,32,16], index: 0, kind: input, shape index: {}]
  %s1 = inlined_call_operand.vmem [shape: f32[2,16,32], index: 1, kind: input, shape index: {}]
  %s2 = inlined_call_operand.hbm [shape: bf16[3,2,32,32], index: 2, kind: input, shape index: {}]
  %s3 = inlined_call_operand.vmem [shape: f32[3,3,32], index: 3, kind: input, shape index: {}]
  %s4 = inlined_call_operand.hbm [shape: bf16[2,32,128], index: 4, kind: input, shape index: {}]
  %s5 = inlined_call_operand.vmem [shape: f32[1,128], index: 5, kind: input, shape index: {}]
  %s6 = inlined_call_operand.hbm [shape: f32[2,16,128], index: 6, kind: output, shape index: {}]
  %s7 = sld [smem:[#allocation0]]
  $region42: #{tpu_custom_call.1} parent=0
    _
  %s9 = ssub.s32 1, %s7
  %s10 = scalar_select 0, %s9, %s7
  $region1: #{tpu_custom_call.1} parent=0
    #allocation2 [shape = 'u8[49152]{0}', space=vmem, size = 0xc000, scoped, tag = 'input window, operand 2, single buffered']
    #allocation3 [shape = 's32[1]{0}', space=sflag, size = 0x4, scoped, tag = 'scoped memory for tpu_custom_call.1']
    #allocation4 [shape = 's32[1]{0}', space=sflag, size = 0x4, scoped, tag = 'scoped memory for tpu_custom_call.1']
    #allocation5 [shape = 'u8[16384]{0}', space=vmem, size = 0x4000, scoped, tag = 'input window, operand 4, single buffered']
    #allocation6 [shape = 's32[1]{0}', space=sflag, size = 0x4, scoped, tag = 'scoped memory for tpu_custom_call.1']
    #allocation7 [shape = 'u8[16384]{0}', space=vmem, size = 0x4000, scoped, tag = 'output window, operand 0, single buffered']
    %11 = vsyncpa [#allocation3], 0
    %12 = vsyncpa [#allocation6], 0
    %13 = vsyncpa [#allocation4], 0
    // Predicated region
    $region2: #{tpu_custom_call.1} parent=1 // pred_check
      _
    $region3: #{tpu_custom_call.1} parent=1 // pred_check_branch
      %15 = sbr.rel (0) target = $region5
    $region4: #{tpu_custom_call.1} parent=1 // pred_region
      _
    $region5: #{tpu_custom_call.1} parent=1 // pred_fallthru
      _
    // Predicated region
    $region6: #{tpu_custom_call.1} parent=1 // pred_check
      _
    $region7: #{tpu_custom_call.1} parent=1 // pred_check_branch
      %17 = sbr.rel (0) target = $region9
    $region8: #{tpu_custom_call.1} parent=1 // pred_region
      _
    $region9: #{tpu_custom_call.1} parent=1 // pred_fallthru
      _
    // Predicated region
    $region10: #{tpu_custom_call.1} parent=1 // pred_check
      _
    $region11: #{tpu_custom_call.1} parent=1 // pred_check_branch
      %19 = sbr.rel (0) target = $region13
    $region12: #{tpu_custom_call.1} parent=1 // pred_region
      %s21 = ssub.s32 1536, 1536
      %22 = vsyncadd [#allocation3], %s21
      %s23 = sshll.u32 [#allocation2], 4
      %s24 = int_to_ptr.vmem [resolvable:$true] %s23
      %29 = dma.hbm_to_vmem [thread:$0]  %s2, 1536, %s24, [#allocation3], 64, 64, 4
    $region13: #{tpu_custom_call.1} parent=1 // pred_fallthru
      _
    // Predicated region
    $region14: #{tpu_custom_call.1} parent=1 // pred_check
      _
    $region15: #{tpu_custom_call.1} parent=1 // pred_check_branch
      %31 = sbr.rel (0) target = $region17
    $region16: #{tpu_custom_call.1} parent=1 // pred_region
      _
    $region17: #{tpu_custom_call.1} parent=1 // pred_fallthru
      _
    // Predicated region
    $region18: #{tpu_custom_call.1} parent=1 // pred_check
      _
    $region19: #{tpu_custom_call.1} parent=1 // pred_check_branch
      %33 = sbr.rel (0) target = $region21
    $region20: #{tpu_custom_call.1} parent=1 // pred_region
      %s35 = ssub.s32 512, 512
      %36 = vsyncadd [#allocation6], %s35
      %s37 = sshll.u32 [#allocation5], 4
      %s38 = int_to_ptr.vmem [resolvable:$true] %s37
      %43 = dma.hbm_to_vmem [thread:$0]  %s4, 512, %s38, [#allocation6], 64, 64, 4
    $region21: #{tpu_custom_call.1} parent=1 // pred_fallthru
      _
    // Predicated region
    $region22: #{tpu_custom_call.1} parent=1 // pred_check
      _
    $region23: #{tpu_custom_call.1} parent=1 // pred_check_branch
      %45 = sbr.rel (0) target = $region25
    $region24: #{tpu_custom_call.1} parent=1 // pred_region
      _
    $region25: #{tpu_custom_call.1} parent=1 // pred_fallthru
      _
    // Predicated region
    $region26: #{tpu_custom_call.1} parent=1 // pred_check
      _
    $region27: #{tpu_custom_call.1} parent=1 // pred_check_branch
      %47 = sbr.rel (0) target = $region29
    $region28: #{tpu_custom_call.1} parent=1 // pred_region
      %48 = dma.done [#allocation3], 1536
    $region29: #{tpu_custom_call.1} parent=1 // pred_fallthru
      _
    // Predicated region
    $region30: #{tpu_custom_call.1} parent=1 // pred_check
      _
    $region31: #{tpu_custom_call.1} parent=1 // pred_check_branch
      %50 = sbr.rel (0) target = $region33
    $region32: #{tpu_custom_call.1} parent=1 // pred_region
      %51 = dma.done [#allocation6], 512
    $region33: #{tpu_custom_call.1} parent=1 // pred_fallthru
      _
    %v53 = vld [vmem:[%s0] sm:$0xf]
    %v54 = vld [vmem:[%s0 + $0x4] sm:$0xf]
    %v55 = vld [vmem:[%s0 + $0x8] sm:$0xf]
    %v56 = vld [vmem:[%s0 + $0xc] sm:$0xf]
    %v57 = vld [vmem:[%s0 + $0x10] sm:$0xf]
    %v58 = vld [vmem:[%s0 + $0x14] sm:$0xf]
    %v59 = vld [vmem:[%s0 + $0x18] sm:$0xf]
    %v60 = vld [vmem:[%s0 + $0x1c] sm:$0xf]
    %v61 = vld [vmem:[#allocation2] sm:$0xf]
    %v62 = vld [vmem:[#allocation2 + $0x4] sm:$0xf]
    %v63 = vld [vmem:[#allocation2 + $0x8] sm:$0xf]
    %v64 = vld [vmem:[#allocation2 + $0xc] sm:$0xf]
    %v65 = vld [vmem:[#allocation2 + $0x10] sm:$0xf]
    %v66 = vld [vmem:[#allocation2 + $0x14] sm:$0xf]
    %v67 = vld [vmem:[#allocation2 + $0x18] sm:$0xf]
    %v68 = vld [vmem:[#allocation2 + $0x1c] sm:$0xf]
    %v69 = vld [vmem:[#allocation2 + $0x20] sm:$0xf]
    %v70 = vld [vmem:[#allocation2 + $0x24] sm:$0xf]
    %v71 = vld [vmem:[#allocation2 + $0x28] sm:$0xf]
    %v72 = vld [vmem:[#allocation2 + $0x2c] sm:$0xf]
    %v73 = vld [vmem:[#allocation2 + $0x30] sm:$0xf]
    %v74 = vld [vmem:[#allocation2 + $0x34] sm:$0xf]
    %v75 = vld [vmem:[#allocation2 + $0x38] sm:$0xf]
    %v76 = vld [vmem:[#allocation2 + $0x3c] sm:$0xf]
    %v77 = vld [vmem:[#allocation2 + $0x40] sm:$0xf]
    %v78 = vld [vmem:[#allocation2 + $0x44] sm:$0xf]
    %v79 = vld [vmem:[#allocation2 + $0x48] sm:$0xf]
    %v80 = vld [vmem:[#allocation2 + $0x4c] sm:$0xf]
    %v81 = vld [vmem:[#allocation2 + $0x50] sm:$0xf]
    %v82 = vld [vmem:[#allocation2 + $0x54] sm:$0xf]
    %v83 = vld [vmem:[#allocation2 + $0x58] sm:$0xf]
    %v84 = vld [vmem:[#allocation2 + $0x5c] sm:$0xf]
    %v85 = vld [vmem:[%s3] sm:$0x7]
    %v86 = vld [vmem:[%s3 + $0x4] sm:$0x7]
    %v87 = vld [vmem:[%s3 + $0x8] sm:$0x7]
    %v88 = vld [vmem:[#allocation5] sm:$0xf]
    %v89 = vld [vmem:[#allocation5 + $0x4] sm:$0xf]
    %v90 = vld [vmem:[#allocation5 + $0x8] sm:$0xf]
    %v91 = vld [vmem:[#allocation5 + $0xc] sm:$0xf]
    %v92 = vld [vmem:[#allocation5 + $0x10] sm:$0xf]
    %v93 = vld [vmem:[#allocation5 + $0x14] sm:$0xf]
    %v94 = vld [vmem:[#allocation5 + $0x18] sm:$0xf]
    %v95 = vld [vmem:[#allocation5 + $0x1c] sm:$0xf]
    %v96 = vld [vmem:[%s5] sm:$0x1]
    %v97 = vlaneseq
    %v98 = vand.u32 %v97, 127
    %vm99 = vcmp.lt.s32.totalorder %v98, 16
    %v100 = vld [vmem:[%s1] sm:$0xff]
    %v101 = vld [vmem:[%s1 + $0x8] sm:$0xff]
    %v102 = vld [vmem:[%s1 + $0x10] sm:$0xff]
    %v103 = vld [vmem:[%s1 + $0x18] sm:$0xff]
    %v104 = vpack.c.bf16 %v101, %v100
    %v105 = vpack.c.bf16 %v103, %v102
    %v110 = vunpack.c.l.b16 %v53
    %v111 = vunpack.c.l.b16 %v54
    %v112 = vunpack.c.l.b16 %v55
    %v113 = vunpack.c.l.b16 %v56
    %v114 = vpack.c.b16 %v111, %v110
    %v115 = vpack.c.b16 %v113, %v112
    %vm116 = vcmask 130048
    %v118 = vsel %vm116, %v114, 0
    %v121 = vsel %vm116, %v115, 0
    %123 = vmatprep.subr.bf16.mxu0 0
    %124 = vmatpush1.bf16.msra.mxu0 %v104
    %125 = vmatprep.subr.bf16.mxu0 0
    %126 = vmatpush1.bf16.msra.mxu0 0
    %127 = vmatprep.subr.bf16.mxu0 0
    %128 = vmatpush1.bf16.msra.mxu0 0
    %129 = vmatprep.subr.bf16.mxu0 0
    %130 = vmatpush1.bf16.msra.mxu0 0
    %131 = vmatprep.subr.bf16.mxu0 0
    %132 = vmatpush1.bf16.msra.mxu0 0
    %133 = vmatprep.subr.bf16.mxu0 0
    %134 = vmatpush1.bf16.msra.mxu0 0
    %135 = vmatprep.subr.bf16.mxu0 0
    %136 = vmatpush1.bf16.msra.mxu0 0
    %137 = vmatprep.subr.bf16.mxu0 0
    %138 = vmatpush1.bf16.msra.mxu0 0
    %139 = vmatprep.subr.bf16.mxu0 0
    %140 = vmatpush1.bf16.msra.mxu0 0
    %141 = vmatprep.subr.bf16.mxu0 0
    %142 = vmatpush1.bf16.msra.mxu0 0
    %143 = vmatprep.subr.bf16.mxu0 0
    %144 = vmatpush1.bf16.msra.mxu0 0
    %145 = vmatprep.subr.bf16.mxu0 0
    %146 = vmatpush1.bf16.msra.mxu0 0
    %147 = vmatprep.subr.bf16.mxu0 0
    %148 = vmatpush1.bf16.msra.mxu0 0
    %149 = vmatprep.subr.bf16.mxu0 0
    %150 = vmatpush1.bf16.msra.mxu0 0
    %151 = vmatprep.subr.bf16.mxu0 0
    %152 = vmatpush1.bf16.msra.mxu0 0
    %153 = vmatprep.subr.bf16.mxu0 0
    %154 = vmatpush1.bf16.msra.mxu0 0
    %155 = vmatprep.mubr.bf16.mxu0 0
    %156 = vmatmul.mubr.bf16.gmra.mrb[0].mxu0 %v118
    %v157 = vpop.f32.mrb[0].mxu0
    %v158 = vadd.f32 0.0, %v157
    %v159 = vpop.f32.mrb[0].mxu0
    %v160 = vpop.f32.mrb[0].mxu0
    %v161 = vadd.f32 0.0, %v160
    %v162 = vpop.f32.mrb[0].mxu0
    %163 = vmatprep.mubr.bf16.mxu0 0
    %164 = vmatmul.mubr.bf16.gmra.mrb[0].mxu0 %v121
    %v165 = vpop.f32.mrb[0].mxu0
    %v166 = vadd.f32 0.0, %v165
    %v167 = vpop.f32.mrb[0].mxu0
    %v168 = vpop.f32.mrb[0].mxu0
    %v169 = vadd.f32 0.0, %v168
    %v170 = vpop.f32.mrb[0].mxu0
    %171 = vdwg.mxu0
    %v176 = vunpack.c.l.b16 %v57
    %v177 = vunpack.c.l.b16 %v58
    %v178 = vunpack.c.l.b16 %v59
    %v179 = vunpack.c.l.b16 %v60
    %v180 = vpack.c.b16 %v177, %v176
    %v181 = vpack.c.b16 %v179, %v178
    %v183 = vsel %vm116, %v180, 0
    %v186 = vsel %vm116, %v181, 0
    %188 = vmatprep.subr.bf16.mxu0 0
    %189 = vmatpush1.bf16.msra.mxu0 %v105
    %190 = vmatprep.subr.bf16.mxu0 0
    %191 = vmatpush1.bf16.msra.mxu0 0
    %192 = vmatprep.subr.bf16.mxu0 0
    %193 = vmatpush1.bf16.msra.mxu0 0
    %194 = vmatprep.subr.bf16.mxu0 0
    %195 = vmatpush1.bf16.msra.mxu0 0
    %196 = vmatprep.subr.bf16.mxu0 0
    %197 = vmatpush1.bf16.msra.mxu0 0
    %198 = vmatprep.subr.bf16.mxu0 0
    %199 = vmatpush1.bf16.msra.mxu0 0
    %200 = vmatprep.subr.bf16.mxu0 0
    %201 = vmatpush1.bf16.msra.mxu0 0
    %202 = vmatprep.subr.bf16.mxu0 0
    %203 = vmatpush1.bf16.msra.mxu0 0
    %204 = vmatprep.subr.bf16.mxu0 0
    %205 = vmatpush1.bf16.msra.mxu0 0
    %206 = vmatprep.subr.bf16.mxu0 0
    %207 = vmatpush1.bf16.msra.mxu0 0
    %208 = vmatprep.subr.bf16.mxu0 0
    %209 = vmatpush1.bf16.msra.mxu0 0
    %210 = vmatprep.subr.bf16.mxu0 0
    %211 = vmatpush1.bf16.msra.mxu0 0
    %212 = vmatprep.subr.bf16.mxu0 0
    %213 = vmatpush1.bf16.msra.mxu0 0
    %214 = vmatprep.subr.bf16.mxu0 0
    %215 = vmatpush1.bf16.msra.mxu0 0
    %216 = vmatprep.subr.bf16.mxu0 0
    %217 = vmatpush1.bf16.msra.mxu0 0
    %218 = vmatprep.subr.bf16.mxu0 0
    %219 = vmatpush1.bf16.msra.mxu0 0
    %220 = vmatprep.mubr.bf16.mxu0 0
    %221 = vmatmul.mubr.bf16.gmra.mrb[0].mxu0 %v183
    %v222 = vpop.f32.mrb[0].mxu0
    %v223 = vadd.f32 0.0, %v222
    %v224 = vpop.f32.mrb[0].mxu0
    %v225 = vpop.f32.mrb[0].mxu0
    %v226 = vadd.f32 0.0, %v225
    %v227 = vpop.f32.mrb[0].mxu0
    %228 = vmatprep.mubr.bf16.mxu0 0
    %229 = vmatmul.mubr.bf16.gmra.mrb[0].mxu0 %v186
    %v230 = vpop.f32.mrb[0].mxu0
    %v231 = vadd.f32 0.0, %v230
    %v232 = vpop.f32.mrb[0].mxu0
    %v233 = vpop.f32.mrb[0].mxu0
    %v234 = vadd.f32 0.0, %v233
    %v235 = vpop.f32.mrb[0].mxu0
    %236 = vdwg.mxu0
    %v237 = vpack.c.bf16 %v161, %v158
    %v238 = vpack.c.bf16 %v169, %v166
    %v239 = vpack.c.bf16 %v226, %v223
    %v240 = vpack.c.bf16 %v234, %v231
    %v245 = vunpack.c.l.b16 %v65
    %v246 = vunpack.c.l.b16 %v66
    %v247 = vunpack.c.l.b16 %v67
    %v248 = vunpack.c.l.b16 %v68
    %v249 = vpack.c.b16 %v246, %v245
    %v250 = vpack.c.b16 %v248, %v247
    %vm253 = vcmask 261120
    %v255 = vsel %vm253, %v238, 0
    %v258 = vsel %vm253, %v240, 0
    %260 = vmatprep.subr.bf16.mxu0 0
    %261 = vmatpush1.bf16.msra.mxu0 %v249
    %262 = vmatprep.subr.bf16.mxu0 0
    %263 = vmatpush1.bf16.msra.mxu0 %v250
    %264 = vmatprep.subr.bf16.mxu0 0
    %265 = vmatpush1.bf16.msra.mxu0 0
    %266 = vmatprep.subr.bf16.mxu0 0
    %267 = vmatpush1.bf16.msra.mxu0 0
    %268 = vmatprep.subr.bf16.mxu0 0
    %269 = vmatpush1.bf16.msra.mxu0 0
    %270 = vmatprep.subr.bf16.mxu0 0
    %271 = vmatpush1.bf16.msra.mxu0 0
    %272 = vmatprep.subr.bf16.mxu0 0
    %273 = vmatpush1.bf16.msra.mxu0 0
    %274 = vmatprep.subr.bf16.mxu0 0
    %275 = vmatpush1.bf16.msra.mxu0 0
    %276 = vmatprep.subr.bf16.mxu0 0
    %277 = vmatpush1.bf16.msra.mxu0 0
    %278 = vmatprep.subr.bf16.mxu0 0
    %279 = vmatpush1.bf16.msra.mxu0 0
    %280 = vmatprep.subr.bf16.mxu0 0
    %281 = vmatpush1.bf16.msra.mxu0 0
    %282 = vmatprep.subr.bf16.mxu0 0
    %283 = vmatpush1.bf16.msra.mxu0 0
    %284 = vmatprep.subr.bf16.mxu0 0
    %285 = vmatpush1.bf16.msra.mxu0 0
    %286 = vmatprep.subr.bf16.mxu0 0
    %287 = vmatpush1.bf16.msra.mxu0 0
    %288 = vmatprep.subr.bf16.mxu0 0
    %289 = vmatpush1.bf16.msra.mxu0 0
    %290 = vmatprep.subr.bf16.mxu0 0
    %291 = vmatpush1.bf16.msra.mxu0 0
    %292 = vmatprep.mubr.bf16.mxu0 0
    %293 = vmatmul.mubr.bf16.gmra.mrb[0].mxu0 %v255
    %v294 = vpop.f32.mrb[0].mxu0
    %v295 = vadd.f32 0.0, %v294
    %v296 = vpop.f32.mrb[0].mxu0
    %v297 = vpop.f32.mrb[0].mxu0
    %v298 = vadd.f32 0.0, %v297
    %v299 = vpop.f32.mrb[0].mxu0
    %300 = vmatprep.mubr.bf16.mxu0 0
    %301 = vmatmul.mubr.bf16.gmra.mrb[0].mxu0 %v258
    %v302 = vpop.f32.mrb[0].mxu0
    %v303 = vadd.f32 0.0, %v302
    %v304 = vpop.f32.mrb[0].mxu0
    %v305 = vpop.f32.mrb[0].mxu0
    %v306 = vadd.f32 0.0, %v305
    %v307 = vpop.f32.mrb[0].mxu0
    %308 = vdwg.mxu0
    %v313 = vunpack.c.l.b16 %v61
    %v314 = vunpack.c.l.b16 %v62
    %v315 = vunpack.c.l.b16 %v63
    %v316 = vunpack.c.l.b16 %v64
    %v317 = vpack.c.b16 %v314, %v313
    %v318 = vpack.c.b16 %v316, %v315
    %v322 = vsel %vm253, %v237, 0
    %v325 = vsel %vm253, %v239, 0
    %327 = vmatprep.subr.bf16.mxu0 0
    %328 = vmatpush1.bf16.msra.mxu0 %v317
    %329 = vmatprep.subr.bf16.mxu0 0
    %330 = vmatpush1.bf16.msra.mxu0 %v318
    %331 = vmatprep.subr.bf16.mxu0 0
    %332 = vmatpush1.bf16.msra.mxu0 0
    %333 = vmatprep.subr.bf16.mxu0 0
    %334 = vmatpush1.bf16.msra.mxu0 0
    %335 = vmatprep.subr.bf16.mxu0 0
    %336 = vmatpush1.bf16.msra.mxu0 0
    %337 = vmatprep.subr.bf16.mxu0 0
    %338 = vmatpush1.bf16.msra.mxu0 0
    %339 = vmatprep.subr.bf16.mxu0 0
    %340 = vmatpush1.bf16.msra.mxu0 0
    %341 = vmatprep.subr.bf16.mxu0 0
    %342 = vmatpush1.bf16.msra.mxu0 0
    %343 = vmatprep.subr.bf16.mxu0 0
    %344 = vmatpush1.bf16.msra.mxu0 0
    %345 = vmatprep.subr.bf16.mxu0 0
    %346 = vmatpush1.bf16.msra.mxu0 0
    %347 = vmatprep.subr.bf16.mxu0 0
    %348 = vmatpush1.bf16.msra.mxu0 0
    %349 = vmatprep.subr.bf16.mxu0 0
    %350 = vmatpush1.bf16.msra.mxu0 0
    %351 = vmatprep.subr.bf16.mxu0 0
    %352 = vmatpush1.bf16.msra.mxu0 0
    %353 = vmatprep.subr.bf16.mxu0 0
    %354 = vmatpush1.bf16.msra.mxu0 0
    %355 = vmatprep.subr.bf16.mxu0 0
    %356 = vmatpush1.bf16.msra.mxu0 0
    %357 = vmatprep.subr.bf16.mxu0 0
    %358 = vmatpush1.bf16.msra.mxu0 0
    %359 = vmatprep.mubr.bf16.mxu0 0
    %360 = vmatmul.mubr.bf16.gmra.mrb[0].mxu0 %v322
    %v361 = vpop.f32.mrb[0].mxu0
    %v362 = vadd.f32 %v295, %v361
    %v363 = vpop.f32.mrb[0].mxu0
    %v364 = vpop.f32.mrb[0].mxu0
    %v365 = vadd.f32 %v298, %v364
    %v366 = vpop.f32.mrb[0].mxu0
    %367 = vmatprep.mubr.bf16.mxu0 0
    %368 = vmatmul.mubr.bf16.gmra.mrb[0].mxu0 %v325
    %v369 = vpop.f32.mrb[0].mxu0
    %v370 = vadd.f32 %v303, %v369
    %v371 = vpop.f32.mrb[0].mxu0
    %v372 = vpop.f32.mrb[0].mxu0
    %v373 = vadd.f32 %v306, %v372
    %v374 = vpop.f32.mrb[0].mxu0
    %375 = vdwg.mxu0
    %v376 = vlaneseq
    %v377 = vshrl.u32 %v376, 7
    %v378 = vsub.s32 0, %v377
    %v379 = vrot.slane %v85, %v378
    %v380 = vadd.f32 %v362, %v379
    %v381 = vadd.f32 %v365, %v379
    %v382 = vadd.f32 %v370, %v379
    %v383 = vadd.f32 %v373, %v379
    %v384 = vmax.f32 %v380, 0.0
    %v385 = vmax.f32 %v381, 0.0
    %v386 = vmax.f32 %v382, 0.0
    %v387 = vmax.f32 %v383, 0.0
    %v388 = vsel %vm99, 1, 0
    %vm389 = vcmp.eq.s32.totalorder %v388, 1
    %v390 = vsel %vm389, %v384, %v380
    %v391 = vsel %vm389, %v385, %v381
    %v392 = vsel %vm389, %v386, %v382
    %v393 = vsel %vm389, %v387, %v383
    %v394 = vsel %vm253, %v390, 0.0
    %v395 = vsel %vm253, %v391, 0.0
    %v396 = vadd.f32 %v394, %v395
    %v397 = vsel %vm253, %v392, 0.0
    %v398 = vadd.f32 %v396, %v397
    %v399 = vsel %vm253, %v393, 0.0
    %v400 = vadd.f32 %v398, %v399
    %v401 = vrot.slane %v400, 4
    %v402 = vadd.f32 %v400, %v401
    %v403 = vrot.slane %v402, 2
    %v404 = vadd.f32 %v402, %v403
    %v405 = vrot.slane %v404, 1
    %v406 = vadd.f32 %v404, %v405
    %v407 = vmul.f32 %v390, %v390
    %v408 = vmul.f32 %v391, %v391
    %v409 = vmul.f32 %v392, %v392
    %v410 = vmul.f32 %v393, %v393
    %v411 = vsel %vm253, %v407, 0.0
    %v412 = vsel %vm253, %v408, 0.0
    %v413 = vadd.f32 %v411, %v412
    %v414 = vsel %vm253, %v409, 0.0
    %v415 = vadd.f32 %v413, %v414
    %v416 = vsel %vm253, %v410, 0.0
    %v417 = vadd.f32 %v415, %v416
    %v418 = vrot.slane %v417, 4
    %v419 = vadd.f32 %v417, %v418
    %v420 = vrot.slane %v419, 2
    %v421 = vadd.f32 %v419, %v420
    %v422 = vrot.slane %v421, 1
    %v423 = vadd.f32 %v421, %v422
    %v424 = vmul.f32 %v406, 0.03125
    %v425 = vmul.f32 %v423, 0.03125
    %v426 = vmul.f32 %v424, %v424
    %v427 = vsub.f32 %v425, %v426
    %v428 = vmax.f32 %v427, 0.0
    %v429 = vadd.f32 %v428, 1e-05
    %v430 = vrsqrt.pop %v429
    %v431 = vmul.f32 %v430, %v85
    %v432 = vsub.f32 %v390, %v424
    %v433 = vsub.f32 %v391, %v424
    %v434 = vsub.f32 %v392, %v424
    %v435 = vsub.f32 %v393, %v424
    %v436 = vlaneseq
    %v437 = vshrl.u32 %v436, 7
    %v438 = vsub.s32 1, %v437
    %v439 = vrot.slane %v431, %v438
    %v440 = vmul.f32 %v432, %v439
    %v441 = vmul.f32 %v433, %v439
    %v442 = vmul.f32 %v434, %v439
    %v443 = vmul.f32 %v435, %v439
    %v444 = vlaneseq
    %v445 = vshrl.u32 %v444, 7
    %v446 = vsub.s32 2, %v445
    %v447 = vrot.slane %v85, %v446
    %v448 = vadd.f32 %v440, %v447
    %v449 = vadd.f32 %v441, %v447
    %v450 = vadd.f32 %v442, %v447
    %v451 = vadd.f32 %v443, %v447
    %v452 = vpack.c.bf16 %v449, %v448
    %v453 = vpack.c.bf16 %v451, %v450
    %454 = vmatprep.subr.bf16.mxu0 0
    %455 = vmatpush1.bf16.msra.mxu0 %v452
    %456 = vmatprep.subr.bf16.mxu0 0
    %457 = vmatpush1.bf16.msra.mxu0 0
    %458 = vmatprep.subr.bf16.mxu0 0
    %459 = vmatpush1.bf16.msra.mxu0 0
    %460 = vmatprep.subr.bf16.mxu0 0
    %461 = vmatpush1.bf16.msra.mxu0 0
    %462 = vmatprep.subr.bf16.mxu0 0
    %463 = vmatpush1.bf16.msra.mxu0 0
    %464 = vmatprep.subr.bf16.mxu0 0
    %465 = vmatpush1.bf16.msra.mxu0 0
    %466 = vmatprep.subr.bf16.mxu0 0
    %467 = vmatpush1.bf16.msra.mxu0 0
    %468 = vmatprep.subr.bf16.mxu0 0
    %469 = vmatpush1.bf16.msra.mxu0 0
    %470 = vmatprep.subr.bf16.mxu0 0
    %471 = vmatpush1.bf16.msra.mxu0 0
    %472 = vmatprep.subr.bf16.mxu0 0
    %473 = vmatpush1.bf16.msra.mxu0 0
    %474 = vmatprep.subr.bf16.mxu0 0
    %475 = vmatpush1.bf16.msra.mxu0 0
    %476 = vmatprep.subr.bf16.mxu0 0
    %477 = vmatpush1.bf16.msra.mxu0 0
    %478 = vmatprep.subr.bf16.mxu0 0
    %479 = vmatpush1.bf16.msra.mxu0 0
    %480 = vmatprep.subr.bf16.mxu0 0
    %481 = vmatpush1.bf16.msra.mxu0 0
    %482 = vmatprep.subr.bf16.mxu0 0
    %483 = vmatpush1.bf16.msra.mxu0 0
    %484 = vmatprep.subr.bf16.mxu0 0
    %485 = vmatpush1.bf16.msra.mxu0 0
    %486 = vmatprep.mubr.bf16.mxu0 0
    %487 = vmatmul.mubr.bf16.gmra.mrb[0].mxu0 %v118
    %v488 = vpop.f32.mrb[0].mxu0
    %v489 = vadd.f32 0.0, %v488
    %v490 = vpop.f32.mrb[0].mxu0
    %v491 = vpop.f32.mrb[0].mxu0
    %v492 = vadd.f32 0.0, %v491
    %v493 = vpop.f32.mrb[0].mxu0
    %494 = vmatprep.mubr.bf16.mxu0 0
    %495 = vmatmul.mubr.bf16.gmra.mrb[0].mxu0 %v121
    %v496 = vpop.f32.mrb[0].mxu0
    %v497 = vadd.f32 0.0, %v496
    %v498 = vpop.f32.mrb[0].mxu0
    %v499 = vpop.f32.mrb[0].mxu0
    %v500 = vadd.f32 0.0, %v499
    %v501 = vpop.f32.mrb[0].mxu0
    %502 = vdwg.mxu0
    %503 = vmatprep.subr.bf16.mxu0 0
    %504 = vmatpush1.bf16.msra.mxu0 %v453
    %505 = vmatprep.subr.bf16.mxu0 0
    %506 = vmatpush1.bf16.msra.mxu0 0
    %507 = vmatprep.subr.bf16.mxu0 0
    %508 = vmatpush1.bf16.msra.mxu0 0
    %509 = vmatprep.subr.bf16.mxu0 0
    %510 = vmatpush1.bf16.msra.mxu0 0
    %511 = vmatprep.subr.bf16.mxu0 0
    %512 = vmatpush1.bf16.msra.mxu0 0
    %513 = vmatprep.subr.bf16.mxu0 0
    %514 = vmatpush1.bf16.msra.mxu0 0
    %515 = vmatprep.subr.bf16.mxu0 0
    %516 = vmatpush1.bf16.msra.mxu0 0
    %517 = vmatprep.subr.bf16.mxu0 0
    %518 = vmatpush1.bf16.msra.mxu0 0
    %519 = vmatprep.subr.bf16.mxu0 0
    %520 = vmatpush1.bf16.msra.mxu0 0
    %521 = vmatprep.subr.bf16.mxu0 0
    %522 = vmatpush1.bf16.msra.mxu0 0
    %523 = vmatprep.subr.bf16.mxu0 0
    %524 = vmatpush1.bf16.msra.mxu0 0
    %525 = vmatprep.subr.bf16.mxu0 0
    %526 = vmatpush1.bf16.msra.mxu0 0
    %527 = vmatprep.subr.bf16.mxu0 0
    %528 = vmatpush1.bf16.msra.mxu0 0
    %529 = vmatprep.subr.bf16.mxu0 0
    %530 = vmatpush1.bf16.msra.mxu0 0
    %531 = vmatprep.subr.bf16.mxu0 0
    %532 = vmatpush1.bf16.msra.mxu0 0
    %533 = vmatprep.subr.bf16.mxu0 0
    %534 = vmatpush1.bf16.msra.mxu0 0
    %535 = vmatprep.mubr.bf16.mxu0 0
    %536 = vmatmul.mubr.bf16.gmra.mrb[0].mxu0 %v183
    %v537 = vpop.f32.mrb[0].mxu0
    %v538 = vadd.f32 0.0, %v537
    %v539 = vpop.f32.mrb[0].mxu0
    %v540 = vpop.f32.mrb[0].mxu0
    %v541 = vadd.f32 0.0, %v540
    %v542 = vpop.f32.mrb[0].mxu0
    %543 = vmatprep.mubr.bf16.mxu0 0
    %544 = vmatmul.mubr.bf16.gmra.mrb[0].mxu0 %v186
    %v545 = vpop.f32.mrb[0].mxu0
    %v546 = vadd.f32 0.0, %v545
    %v547 = vpop.f32.mrb[0].mxu0
    %v548 = vpop.f32.mrb[0].mxu0
    %v549 = vadd.f32 0.0, %v548
    %v550 = vpop.f32.mrb[0].mxu0
    %551 = vdwg.mxu0
    %v552 = vpack.c.bf16 %v492, %v489
    %v553 = vpack.c.bf16 %v500, %v497
    %v554 = vpack.c.bf16 %v541, %v538
    %v555 = vpack.c.bf16 %v549, %v546
    %v560 = vunpack.c.l.b16 %v73
    %v561 = vunpack.c.l.b16 %v74
    %v562 = vunpack.c.l.b16 %v75
    %v563 = vunpack.c.l.b16 %v76
    %v564 = vpack.c.b16 %v561, %v560
    %v565 = vpack.c.b16 %v563, %v562
    %v569 = vsel %vm253, %v553, 0
    %v572 = vsel %vm253, %v555, 0
    %574 = vmatprep.subr.bf16.mxu0 0
    %575 = vmatpush1.bf16.msra.mxu0 %v564
    %576 = vmatprep.subr.bf16.mxu0 0
    %577 = vmatpush1.bf16.msra.mxu0 %v565
    %578 = vmatprep.subr.bf16.mxu0 0
    %579 = vmatpush1.bf16.msra.mxu0 0
    %580 = vmatprep.subr.bf16.mxu0 0
    %581 = vmatpush1.bf16.msra.mxu0 0
    %582 = vmatprep.subr.bf16.mxu0 0
    %583 = vmatpush1.bf16.msra.mxu0 0
    %584 = vmatprep.subr.bf16.mxu0 0
    %585 = vmatpush1.bf16.msra.mxu0 0
    %586 = vmatprep.subr.bf16.mxu0 0
    %587 = vmatpush1.bf16.msra.mxu0 0
    %588 = vmatprep.subr.bf16.mxu0 0
    %589 = vmatpush1.bf16.msra.mxu0 0
    %590 = vmatprep.subr.bf16.mxu0 0
    %591 = vmatpush1.bf16.msra.mxu0 0
    %592 = vmatprep.subr.bf16.mxu0 0
    %593 = vmatpush1.bf16.msra.mxu0 0
    %594 = vmatprep.subr.bf16.mxu0 0
    %595 = vmatpush1.bf16.msra.mxu0 0
    %596 = vmatprep.subr.bf16.mxu0 0
    %597 = vmatpush1.bf16.msra.mxu0 0
    %598 = vmatprep.subr.bf16.mxu0 0
    %599 = vmatpush1.bf16.msra.mxu0 0
    %600 = vmatprep.subr.bf16.mxu0 0
    %601 = vmatpush1.bf16.msra.mxu0 0
    %602 = vmatprep.subr.bf16.mxu0 0
    %603 = vmatpush1.bf16.msra.mxu0 0
    %604 = vmatprep.subr.bf16.mxu0 0
    %605 = vmatpush1.bf16.msra.mxu0 0
    %606 = vmatprep.mubr.bf16.mxu0 0
    %607 = vmatmul.mubr.bf16.gmra.mrb[0].mxu0 %v569
    %v608 = vpop.f32.mrb[0].mxu0
    %v609 = vadd.f32 0.0, %v608
    %v610 = vpop.f32.mrb[0].mxu0
    %v611 = vpop.f32.mrb[0].mxu0
    %v612 = vadd.f32 0.0, %v611
    %v613 = vpop.f32.mrb[0].mxu0
    %614 = vmatprep.mubr.bf16.mxu0 0
    %615 = vmatmul.mubr.bf16.gmra.mrb[0].mxu0 %v572
    %v616 = vpop.f32.mrb[0].mxu0
    %v617 = vadd.f32 0.0, %v616
    %v618 = vpop.f32.mrb[0].mxu0
    %v619 = vpop.f32.mrb[0].mxu0
    %v620 = vadd.f32 0.0, %v619
    %v621 = vpop.f32.mrb[0].mxu0
    %622 = vdwg.mxu0
    %v627 = vunpack.c.l.b16 %v69
    %v628 = vunpack.c.l.b16 %v70
    %v629 = vunpack.c.l.b16 %v71
    %v630 = vunpack.c.l.b16 %v72
    %v631 = vpack.c.b16 %v628, %v627
    %v632 = vpack.c.b16 %v630, %v629
    %v636 = vsel %vm253, %v552, 0
    %v639 = vsel %vm253, %v554, 0
    %641 = vmatprep.subr.bf16.mxu0 0
    %642 = vmatpush1.bf16.msra.mxu0 %v631
    %643 = vmatprep.subr.bf16.mxu0 0
    %644 = vmatpush1.bf16.msra.mxu0 %v632
    %645 = vmatprep.subr.bf16.mxu0 0
    %646 = vmatpush1.bf16.msra.mxu0 0
    %647 = vmatprep.subr.bf16.mxu0 0
    %648 = vmatpush1.bf16.msra.mxu0 0
    %649 = vmatprep.subr.bf16.mxu0 0
    %650 = vmatpush1.bf16.msra.mxu0 0
    %651 = vmatprep.subr.bf16.mxu0 0
    %652 = vmatpush1.bf16.msra.mxu0 0
    %653 = vmatprep.subr.bf16.mxu0 0
    %654 = vmatpush1.bf16.msra.mxu0 0
    %655 = vmatprep.subr.bf16.mxu0 0
    %656 = vmatpush1.bf16.msra.mxu0 0
    %657 = vmatprep.subr.bf16.mxu0 0
    %658 = vmatpush1.bf16.msra.mxu0 0
    %659 = vmatprep.subr.bf16.mxu0 0
    %660 = vmatpush1.bf16.msra.mxu0 0
    %661 = vmatprep.subr.bf16.mxu0 0
    %662 = vmatpush1.bf16.msra.mxu0 0
    %663 = vmatprep.subr.bf16.mxu0 0
    %664 = vmatpush1.bf16.msra.mxu0 0
    %665 = vmatprep.subr.bf16.mxu0 0
    %666 = vmatpush1.bf16.msra.mxu0 0
    %667 = vmatprep.subr.bf16.mxu0 0
    %668 = vmatpush1.bf16.msra.mxu0 0
    %669 = vmatprep.subr.bf16.mxu0 0
    %670 = vmatpush1.bf16.msra.mxu0 0
    %671 = vmatprep.subr.bf16.mxu0 0
    %672 = vmatpush1.bf16.msra.mxu0 0
    %673 = vmatprep.mubr.bf16.mxu0 0
    %674 = vmatmul.mubr.bf16.gmra.mrb[0].mxu0 %v636
    %v675 = vpop.f32.mrb[0].mxu0
    %v676 = vadd.f32 %v609, %v675
    %v677 = vpop.f32.mrb[0].mxu0
    %v678 = vpop.f32.mrb[0].mxu0
    %v679 = vadd.f32 %v612, %v678
    %v680 = vpop.f32.mrb[0].mxu0
    %681 = vmatprep.mubr.bf16.mxu0 0
    %682 = vmatmul.mubr.bf16.gmra.mrb[0].mxu0 %v639
    %v683 = vpop.f32.mrb[0].mxu0
    %v684 = vadd.f32 %v617, %v683
    %v685 = vpop.f32.mrb[0].mxu0
    %v686 = vpop.f32.mrb[0].mxu0
    %v687 = vadd.f32 %v620, %v686
    %v688 = vpop.f32.mrb[0].mxu0
    %689 = vdwg.mxu0
    %v690 = vlaneseq
    %v691 = vshrl.u32 %v690, 7
    %v692 = vsub.s32 0, %v691
    %v693 = vrot.slane %v86, %v692
    %v694 = vadd.f32 %v676, %v693
    %v695 = vadd.f32 %v679, %v693
    %v696 = vadd.f32 %v684, %v693
    %v697 = vadd.f32 %v687, %v693
    %v698 = vmax.f32 %v694, 0.0
    %v699 = vmax.f32 %v695, 0.0
    %v700 = vmax.f32 %v696, 0.0
    %v701 = vmax.f32 %v697, 0.0
    %v702 = vsel %vm389, %v698, %v694
    %v703 = vsel %vm389, %v699, %v695
    %v704 = vsel %vm389, %v700, %v696
    %v705 = vsel %vm389, %v701, %v697
    %v706 = vsel %vm253, %v702, 0.0
    %v707 = vsel %vm253, %v703, 0.0
    %v708 = vadd.f32 %v706, %v707
    %v709 = vsel %vm253, %v704, 0.0
    %v710 = vadd.f32 %v708, %v709
    %v711 = vsel %vm253, %v705, 0.0
    %v712 = vadd.f32 %v710, %v711
    %v713 = vrot.slane %v712, 4
    %v714 = vadd.f32 %v712, %v713
    %v715 = vrot.slane %v714, 2
    %v716 = vadd.f32 %v714, %v715
    %v717 = vrot.slane %v716, 1
    %v718 = vadd.f32 %v716, %v717
    %v719 = vmul.f32 %v702, %v702
    %v720 = vmul.f32 %v703, %v703
    %v721 = vmul.f32 %v704, %v704
    %v722 = vmul.f32 %v705, %v705
    %v723 = vsel %vm253, %v719, 0.0
    %v724 = vsel %vm253, %v720, 0.0
    %v725 = vadd.f32 %v723, %v724
    %v726 = vsel %vm253, %v721, 0.0
    %v727 = vadd.f32 %v725, %v726
    %v728 = vsel %vm253, %v722, 0.0
    %v729 = vadd.f32 %v727, %v728
    %v730 = vrot.slane %v729, 4
    %v731 = vadd.f32 %v729, %v730
    %v732 = vrot.slane %v731, 2
    %v733 = vadd.f32 %v731, %v732
    %v734 = vrot.slane %v733, 1
    %v735 = vadd.f32 %v733, %v734
    %v736 = vmul.f32 %v718, 0.03125
    %v737 = vmul.f32 %v735, 0.03125
    %v738 = vmul.f32 %v736, %v736
    %v739 = vsub.f32 %v737, %v738
    %v740 = vmax.f32 %v739, 0.0
    %v741 = vadd.f32 %v740, 1e-05
    %v742 = vrsqrt.pop %v741
    %v743 = vmul.f32 %v742, %v86
    %v744 = vsub.f32 %v702, %v736
    %v745 = vsub.f32 %v703, %v736
    %v746 = vsub.f32 %v704, %v736
    %v747 = vsub.f32 %v705, %v736
    %v748 = vlaneseq
    %v749 = vshrl.u32 %v748, 7
    %v750 = vsub.s32 1, %v749
    %v751 = vrot.slane %v743, %v750
    %v752 = vmul.f32 %v744, %v751
    %v753 = vmul.f32 %v745, %v751
    %v754 = vmul.f32 %v746, %v751
    %v755 = vmul.f32 %v747, %v751
    %v756 = vlaneseq
    %v757 = vshrl.u32 %v756, 7
    %v758 = vsub.s32 2, %v757
    %v759 = vrot.slane %v86, %v758
    %v760 = vadd.f32 %v752, %v759
    %v761 = vadd.f32 %v753, %v759
    %v762 = vadd.f32 %v754, %v759
    %v763 = vadd.f32 %v755, %v759
    %v764 = vpack.c.bf16 %v761, %v760
    %v765 = vpack.c.bf16 %v763, %v762
    %766 = vmatprep.subr.bf16.mxu0 0
    %767 = vmatpush1.bf16.msra.mxu0 %v764
    %768 = vmatprep.subr.bf16.mxu0 0
    %769 = vmatpush1.bf16.msra.mxu0 0
    %770 = vmatprep.subr.bf16.mxu0 0
    %771 = vmatpush1.bf16.msra.mxu0 0
    %772 = vmatprep.subr.bf16.mxu0 0
    %773 = vmatpush1.bf16.msra.mxu0 0
    %774 = vmatprep.subr.bf16.mxu0 0
    %775 = vmatpush1.bf16.msra.mxu0 0
    %776 = vmatprep.subr.bf16.mxu0 0
    %777 = vmatpush1.bf16.msra.mxu0 0
    %778 = vmatprep.subr.bf16.mxu0 0
    %779 = vmatpush1.bf16.msra.mxu0 0
    %780 = vmatprep.subr.bf16.mxu0 0
    %781 = vmatpush1.bf16.msra.mxu0 0
    %782 = vmatprep.subr.bf16.mxu0 0
    %783 = vmatpush1.bf16.msra.mxu0 0
    %784 = vmatprep.subr.bf16.mxu0 0
    %785 = vmatpush1.bf16.msra.mxu0 0
    %786 = vmatprep.subr.bf16.mxu0 0
    %787 = vmatpush1.bf16.msra.mxu0 0
    %788 = vmatprep.subr.bf16.mxu0 0
    %789 = vmatpush1.bf16.msra.mxu0 0
    %790 = vmatprep.subr.bf16.mxu0 0
    %791 = vmatpush1.bf16.msra.mxu0 0
    %792 = vmatprep.subr.bf16.mxu0 0
    %793 = vmatpush1.bf16.msra.mxu0 0
    %794 = vmatprep.subr.bf16.mxu0 0
    %795 = vmatpush1.bf16.msra.mxu0 0
    %796 = vmatprep.subr.bf16.mxu0 0
    %797 = vmatpush1.bf16.msra.mxu0 0
    %798 = vmatprep.mubr.bf16.mxu0 0
    %799 = vmatmul.mubr.bf16.gmra.mrb[0].mxu0 %v118
    %v800 = vpop.f32.mrb[0].mxu0
    %v801 = vadd.f32 0.0, %v800
    %v802 = vpop.f32.mrb[0].mxu0
    %v803 = vpop.f32.mrb[0].mxu0
    %v804 = vadd.f32 0.0, %v803
    %v805 = vpop.f32.mrb[0].mxu0
    %806 = vmatprep.mubr.bf16.mxu0 0
    %807 = vmatmul.mubr.bf16.gmra.mrb[0].mxu0 %v121
    %v808 = vpop.f32.mrb[0].mxu0
    %v809 = vadd.f32 0.0, %v808
    %v810 = vpop.f32.mrb[0].mxu0
    %v811 = vpop.f32.mrb[0].mxu0
    %v812 = vadd.f32 0.0, %v811
    %v813 = vpop.f32.mrb[0].mxu0
    %814 = vdwg.mxu0
    %815 = vmatprep.subr.bf16.mxu0 0
    %816 = vmatpush1.bf16.msra.mxu0 %v765
    %817 = vmatprep.subr.bf16.mxu0 0
    %818 = vmatpush1.bf16.msra.mxu0 0
    %819 = vmatprep.subr.bf16.mxu0 0
    %820 = vmatpush1.bf16.msra.mxu0 0
    %821 = vmatprep.subr.bf16.mxu0 0
    %822 = vmatpush1.bf16.msra.mxu0 0
    %823 = vmatprep.subr.bf16.mxu0 0
    %824 = vmatpush1.bf16.msra.mxu0 0
    %825 = vmatprep.subr.bf16.mxu0 0
    %826 = vmatpush1.bf16.msra.mxu0 0
    %827 = vmatprep.subr.bf16.mxu0 0
    %828 = vmatpush1.bf16.msra.mxu0 0
    %829 = vmatprep.subr.bf16.mxu0 0
    %830 = vmatpush1.bf16.msra.mxu0 0
    %831 = vmatprep.subr.bf16.mxu0 0
    %832 = vmatpush1.bf16.msra.mxu0 0
    %833 = vmatprep.subr.bf16.mxu0 0
    %834 = vmatpush1.bf16.msra.mxu0 0
    %835 = vmatprep.subr.bf16.mxu0 0
    %836 = vmatpush1.bf16.msra.mxu0 0
    %837 = vmatprep.subr.bf16.mxu0 0
    %838 = vmatpush1.bf16.msra.mxu0 0
    %839 = vmatprep.subr.bf16.mxu0 0
    %840 = vmatpush1.bf16.msra.mxu0 0
    %841 = vmatprep.subr.bf16.mxu0 0
    %842 = vmatpush1.bf16.msra.mxu0 0
    %843 = vmatprep.subr.bf16.mxu0 0
    %844 = vmatpush1.bf16.msra.mxu0 0
    %845 = vmatprep.subr.bf16.mxu0 0
    %846 = vmatpush1.bf16.msra.mxu0 0
    %847 = vmatprep.mubr.bf16.mxu0 0
    %848 = vmatmul.mubr.bf16.gmra.mrb[0].mxu0 %v183
    %v849 = vpop.f32.mrb[0].mxu0
    %v850 = vadd.f32 0.0, %v849
    %v851 = vpop.f32.mrb[0].mxu0
    %v852 = vpop.f32.mrb[0].mxu0
    %v853 = vadd.f32 0.0, %v852
    %v854 = vpop.f32.mrb[0].mxu0
    %855 = vmatprep.mubr.bf16.mxu0 0
    %856 = vmatmul.mubr.bf16.gmra.mrb[0].mxu0 %v186
    %v857 = vpop.f32.mrb[0].mxu0
    %v858 = vadd.f32 0.0, %v857
    %v859 = vpop.f32.mrb[0].mxu0
    %v860 = vpop.f32.mrb[0].mxu0
    %v861 = vadd.f32 0.0, %v860
    %v862 = vpop.f32.mrb[0].mxu0
    %863 = vdwg.mxu0
    %v864 = vpack.c.bf16 %v804, %v801
    %v865 = vpack.c.bf16 %v812, %v809
    %v866 = vpack.c.bf16 %v853, %v850
    %v867 = vpack.c.bf16 %v861, %v858
    %v872 = vunpack.c.l.b16 %v81
    %v873 = vunpack.c.l.b16 %v82
    %v874 = vunpack.c.l.b16 %v83
    %v875 = vunpack.c.l.b16 %v84
    %v876 = vpack.c.b16 %v873, %v872
    %v877 = vpack.c.b16 %v875, %v874
    %v881 = vsel %vm253, %v865, 0
    %v884 = vsel %vm253, %v867, 0
    %886 = vmatprep.subr.bf16.mxu0 0
    %887 = vmatpush1.bf16.msra.mxu0 %v876
    %888 = vmatprep.subr.bf16.mxu0 0
    %889 = vmatpush1.bf16.msra.mxu0 %v877
    %890 = vmatprep.subr.bf16.mxu0 0
    %891 = vmatpush1.bf16.msra.mxu0 0
    %892 = vmatprep.subr.bf16.mxu0 0
    %893 = vmatpush1.bf16.msra.mxu0 0
    %894 = vmatprep.subr.bf16.mxu0 0
    %895 = vmatpush1.bf16.msra.mxu0 0
    %896 = vmatprep.subr.bf16.mxu0 0
    %897 = vmatpush1.bf16.msra.mxu0 0
    %898 = vmatprep.subr.bf16.mxu0 0
    %899 = vmatpush1.bf16.msra.mxu0 0
    %900 = vmatprep.subr.bf16.mxu0 0
    %901 = vmatpush1.bf16.msra.mxu0 0
    %902 = vmatprep.subr.bf16.mxu0 0
    %903 = vmatpush1.bf16.msra.mxu0 0
    %904 = vmatprep.subr.bf16.mxu0 0
    %905 = vmatpush1.bf16.msra.mxu0 0
    %906 = vmatprep.subr.bf16.mxu0 0
    %907 = vmatpush1.bf16.msra.mxu0 0
    %908 = vmatprep.subr.bf16.mxu0 0
    %909 = vmatpush1.bf16.msra.mxu0 0
    %910 = vmatprep.subr.bf16.mxu0 0
    %911 = vmatpush1.bf16.msra.mxu0 0
    %912 = vmatprep.subr.bf16.mxu0 0
    %913 = vmatpush1.bf16.msra.mxu0 0
    %914 = vmatprep.subr.bf16.mxu0 0
    %915 = vmatpush1.bf16.msra.mxu0 0
    %916 = vmatprep.subr.bf16.mxu0 0
    %917 = vmatpush1.bf16.msra.mxu0 0
    %918 = vmatprep.mubr.bf16.mxu0 0
    %919 = vmatmul.mubr.bf16.gmra.mrb[0].mxu0 %v881
    %v920 = vpop.f32.mrb[0].mxu0
    %v921 = vadd.f32 0.0, %v920
    %v922 = vpop.f32.mrb[0].mxu0
    %v923 = vpop.f32.mrb[0].mxu0
    %v924 = vadd.f32 0.0, %v923
    %v925 = vpop.f32.mrb[0].mxu0
    %926 = vmatprep.mubr.bf16.mxu0 0
    %927 = vmatmul.mubr.bf16.gmra.mrb[0].mxu0 %v884
    %v928 = vpop.f32.mrb[0].mxu0
    %v929 = vadd.f32 0.0, %v928
    %v930 = vpop.f32.mrb[0].mxu0
    %v931 = vpop.f32.mrb[0].mxu0
    %v932 = vadd.f32 0.0, %v931
    %v933 = vpop.f32.mrb[0].mxu0
    %934 = vdwg.mxu0
    %v939 = vunpack.c.l.b16 %v77
    %v940 = vunpack.c.l.b16 %v78
    %v941 = vunpack.c.l.b16 %v79
    %v942 = vunpack.c.l.b16 %v80
    %v943 = vpack.c.b16 %v940, %v939
    %v944 = vpack.c.b16 %v942, %v941
    %v948 = vsel %vm253, %v864, 0
    %v951 = vsel %vm253, %v866, 0
    %953 = vmatprep.subr.bf16.mxu0 0
    %954 = vmatpush1.bf16.msra.mxu0 %v943
    %955 = vmatprep.subr.bf16.mxu0 0
    %956 = vmatpush1.bf16.msra.mxu0 %v944
    %957 = vmatprep.subr.bf16.mxu0 0
    %958 = vmatpush1.bf16.msra.mxu0 0
    %959 = vmatprep.subr.bf16.mxu0 0
    %960 = vmatpush1.bf16.msra.mxu0 0
    %961 = vmatprep.subr.bf16.mxu0 0
    %962 = vmatpush1.bf16.msra.mxu0 0
    %963 = vmatprep.subr.bf16.mxu0 0
    %964 = vmatpush1.bf16.msra.mxu0 0
    %965 = vmatprep.subr.bf16.mxu0 0
    %966 = vmatpush1.bf16.msra.mxu0 0
    %967 = vmatprep.subr.bf16.mxu0 0
    %968 = vmatpush1.bf16.msra.mxu0 0
    %969 = vmatprep.subr.bf16.mxu0 0
    %970 = vmatpush1.bf16.msra.mxu0 0
    %971 = vmatprep.subr.bf16.mxu0 0
    %972 = vmatpush1.bf16.msra.mxu0 0
    %973 = vmatprep.subr.bf16.mxu0 0
    %974 = vmatpush1.bf16.msra.mxu0 0
    %975 = vmatprep.subr.bf16.mxu0 0
    %976 = vmatpush1.bf16.msra.mxu0 0
    %977 = vmatprep.subr.bf16.mxu0 0
    %978 = vmatpush1.bf16.msra.mxu0 0
    %979 = vmatprep.subr.bf16.mxu0 0
    %980 = vmatpush1.bf16.msra.mxu0 0
    %981 = vmatprep.subr.bf16.mxu0 0
    %982 = vmatpush1.bf16.msra.mxu0 0
    %983 = vmatprep.subr.bf16.mxu0 0
    %984 = vmatpush1.bf16.msra.mxu0 0
    %985 = vmatprep.mubr.bf16.mxu0 0
    %986 = vmatmul.mubr.bf16.gmra.mrb[0].mxu0 %v948
    %v987 = vpop.f32.mrb[0].mxu0
    %v988 = vadd.f32 %v921, %v987
    %v989 = vpop.f32.mrb[0].mxu0
    %v990 = vpop.f32.mrb[0].mxu0
    %v991 = vadd.f32 %v924, %v990
    %v992 = vpop.f32.mrb[0].mxu0
    %993 = vmatprep.mubr.bf16.mxu0 0
    %994 = vmatmul.mubr.bf16.gmra.mrb[0].mxu0 %v951
    %v995 = vpop.f32.mrb[0].mxu0
    %v996 = vadd.f32 %v929, %v995
    %v997 = vpop.f32.mrb[0].mxu0
    %v998 = vpop.f32.mrb[0].mxu0
    %v999 = vadd.f32 %v932, %v998
    %v1000 = vpop.f32.mrb[0].mxu0
    %1001 = vdwg.mxu0
    %v1002 = vlaneseq
    %v1003 = vshrl.u32 %v1002, 7
    %v1004 = vsub.s32 0, %v1003
    %v1005 = vrot.slane %v87, %v1004
    %v1006 = vadd.f32 %v988, %v1005
    %v1007 = vadd.f32 %v991, %v1005
    %v1008 = vadd.f32 %v996, %v1005
    %v1009 = vadd.f32 %v999, %v1005
    %v1010 = vmax.f32 %v1006, 0.0
    %v1011 = vmax.f32 %v1007, 0.0
    %v1012 = vmax.f32 %v1008, 0.0
    %v1013 = vmax.f32 %v1009, 0.0
    %v1014 = vsel %vm389, %v1010, %v1006
    %v1015 = vsel %vm389, %v1011, %v1007
    %v1016 = vsel %vm389, %v1012, %v1008
    %v1017 = vsel %vm389, %v1013, %v1009
    %v1018 = vsel %vm253, %v1014, 0.0
    %v1019 = vsel %vm253, %v1015, 0.0
    %v1020 = vadd.f32 %v1018, %v1019
    %v1021 = vsel %vm253, %v1016, 0.0
    %v1022 = vadd.f32 %v1020, %v1021
    %v1023 = vsel %vm253, %v1017, 0.0
    %v1024 = vadd.f32 %v1022, %v1023
    %v1025 = vrot.slane %v1024, 4
    %v1026 = vadd.f32 %v1024, %v1025
    %v1027 = vrot.slane %v1026, 2
    %v1028 = vadd.f32 %v1026, %v1027
    %v1029 = vrot.slane %v1028, 1
    %v1030 = vadd.f32 %v1028, %v1029
    %v1031 = vmul.f32 %v1014, %v1014
    %v1032 = vmul.f32 %v1015, %v1015
    %v1033 = vmul.f32 %v1016, %v1016
    %v1034 = vmul.f32 %v1017, %v1017
    %v1035 = vsel %vm253, %v1031, 0.0
    %v1036 = vsel %vm253, %v1032, 0.0
    %v1037 = vadd.f32 %v1035, %v1036
    %v1038 = vsel %vm253, %v1033, 0.0
    %v1039 = vadd.f32 %v1037, %v1038
    %v1040 = vsel %vm253, %v1034, 0.0
    %v1041 = vadd.f32 %v1039, %v1040
    %v1042 = vrot.slane %v1041, 4
    %v1043 = vadd.f32 %v1041, %v1042
    %v1044 = vrot.slane %v1043, 2
    %v1045 = vadd.f32 %v1043, %v1044
    %v1046 = vrot.slane %v1045, 1
    %v1047 = vadd.f32 %v1045, %v1046
    %v1048 = vmul.f32 %v1030, 0.03125
    %v1049 = vmul.f32 %v1047, 0.03125
    %v1050 = vmul.f32 %v1048, %v1048
    %v1051 = vsub.f32 %v1049, %v1050
    %v1052 = vmax.f32 %v1051, 0.0
    %v1053 = vadd.f32 %v1052, 1e-05
    %v1054 = vrsqrt.pop %v1053
    %v1055 = vmul.f32 %v1054, %v87
    %v1056 = vsub.f32 %v1014, %v1048
    %v1057 = vsub.f32 %v1015, %v1048
    %v1058 = vsub.f32 %v1016, %v1048
    %v1059 = vsub.f32 %v1017, %v1048
    %v1060 = vlaneseq
    %v1061 = vshrl.u32 %v1060, 7
    %v1062 = vsub.s32 1, %v1061
    %v1063 = vrot.slane %v1055, %v1062
    %v1064 = vmul.f32 %v1056, %v1063
    %v1065 = vmul.f32 %v1057, %v1063
    %v1066 = vmul.f32 %v1058, %v1063
    %v1067 = vmul.f32 %v1059, %v1063
    %v1068 = vlaneseq
    %v1069 = vshrl.u32 %v1068, 7
    %v1070 = vsub.s32 2, %v1069
    %v1071 = vrot.slane %v87, %v1070
    %v1072 = vadd.f32 %v1064, %v1071
    %v1073 = vadd.f32 %v1065, %v1071
    %v1074 = vadd.f32 %v1066, %v1071
    %v1075 = vadd.f32 %v1067, %v1071
    %v1076 = vpack.c.bf16 %v1073, %v1072
    %v1077 = vpack.c.bf16 %v1075, %v1074
    %1078 = vmatprep.subr.bf16.mxu0 0
    %1079 = vmatpush1.bf16.msra.mxu0 %v1076
    %1080 = vmatprep.subr.bf16.mxu0 0
    %1081 = vmatpush1.bf16.msra.mxu0 0
    %1082 = vmatprep.subr.bf16.mxu0 0
    %1083 = vmatpush1.bf16.msra.mxu0 0
    %1084 = vmatprep.subr.bf16.mxu0 0
    %1085 = vmatpush1.bf16.msra.mxu0 0
    %1086 = vmatprep.subr.bf16.mxu0 0
    %1087 = vmatpush1.bf16.msra.mxu0 0
    %1088 = vmatprep.subr.bf16.mxu0 0
    %1089 = vmatpush1.bf16.msra.mxu0 0
    %1090 = vmatprep.subr.bf16.mxu0 0
    %1091 = vmatpush1.bf16.msra.mxu0 0
    %1092 = vmatprep.subr.bf16.mxu0 0
    %1093 = vmatpush1.bf16.msra.mxu0 0
    %1094 = vmatprep.subr.bf16.mxu0 0
    %1095 = vmatpush1.bf16.msra.mxu0 0
    %1096 = vmatprep.subr.bf16.mxu0 0
    %1097 = vmatpush1.bf16.msra.mxu0 0
    %1098 = vmatprep.subr.bf16.mxu0 0
    %1099 = vmatpush1.bf16.msra.mxu0 0
    %1100 = vmatprep.subr.bf16.mxu0 0
    %1101 = vmatpush1.bf16.msra.mxu0 0
    %1102 = vmatprep.subr.bf16.mxu0 0
    %1103 = vmatpush1.bf16.msra.mxu0 0
    %1104 = vmatprep.subr.bf16.mxu0 0
    %1105 = vmatpush1.bf16.msra.mxu0 0
    %1106 = vmatprep.subr.bf16.mxu0 0
    %1107 = vmatpush1.bf16.msra.mxu0 0
    %1108 = vmatprep.subr.bf16.mxu0 0
    %1109 = vmatpush1.bf16.msra.mxu0 0
    %1110 = vmatprep.mubr.bf16.mxu0 0
    %1111 = vmatmul.mubr.bf16.gmra.mrb[0].mxu0 %v118
    %v1112 = vpop.f32.mrb[0].mxu0
    %v1113 = vadd.f32 0.0, %v1112
    %v1114 = vpop.f32.mrb[0].mxu0
    %v1115 = vpop.f32.mrb[0].mxu0
    %v1116 = vadd.f32 0.0, %v1115
    %v1117 = vpop.f32.mrb[0].mxu0
    %1118 = vmatprep.mubr.bf16.mxu0 0
    %1119 = vmatmul.mubr.bf16.gmra.mrb[0].mxu0 %v121
    %v1120 = vpop.f32.mrb[0].mxu0
    %v1121 = vadd.f32 0.0, %v1120
    %v1122 = vpop.f32.mrb[0].mxu0
    %v1123 = vpop.f32.mrb[0].mxu0
    %v1124 = vadd.f32 0.0, %v1123
    %v1125 = vpop.f32.mrb[0].mxu0
    %1126 = vdwg.mxu0
    %1127 = vmatprep.subr.bf16.mxu0 0
    %1128 = vmatpush1.bf16.msra.mxu0 %v1077
    %1129 = vmatprep.subr.bf16.mxu0 0
    %1130 = vmatpush1.bf16.msra.mxu0 0
    %1131 = vmatprep.subr.bf16.mxu0 0
    %1132 = vmatpush1.bf16.msra.mxu0 0
    %1133 = vmatprep.subr.bf16.mxu0 0
    %1134 = vmatpush1.bf16.msra.mxu0 0
    %1135 = vmatprep.subr.bf16.mxu0 0
    %1136 = vmatpush1.bf16.msra.mxu0 0
    %1137 = vmatprep.subr.bf16.mxu0 0
    %1138 = vmatpush1.bf16.msra.mxu0 0
    %1139 = vmatprep.subr.bf16.mxu0 0
    %1140 = vmatpush1.bf16.msra.mxu0 0
    %1141 = vmatprep.subr.bf16.mxu0 0
    %1142 = vmatpush1.bf16.msra.mxu0 0
    %1143 = vmatprep.subr.bf16.mxu0 0
    %1144 = vmatpush1.bf16.msra.mxu0 0
    %1145 = vmatprep.subr.bf16.mxu0 0
    %1146 = vmatpush1.bf16.msra.mxu0 0
    %1147 = vmatprep.subr.bf16.mxu0 0
    %1148 = vmatpush1.bf16.msra.mxu0 0
    %1149 = vmatprep.subr.bf16.mxu0 0
    %1150 = vmatpush1.bf16.msra.mxu0 0
    %1151 = vmatprep.subr.bf16.mxu0 0
    %1152 = vmatpush1.bf16.msra.mxu0 0
    %1153 = vmatprep.subr.bf16.mxu0 0
    %1154 = vmatpush1.bf16.msra.mxu0 0
    %1155 = vmatprep.subr.bf16.mxu0 0
    %1156 = vmatpush1.bf16.msra.mxu0 0
    %1157 = vmatprep.subr.bf16.mxu0 0
    %1158 = vmatpush1.bf16.msra.mxu0 0
    %1159 = vmatprep.mubr.bf16.mxu0 0
    %1160 = vmatmul.mubr.bf16.gmra.mrb[0].mxu0 %v183
    %v1161 = vpop.f32.mrb[0].mxu0
    %v1162 = vadd.f32 0.0, %v1161
    %v1163 = vpop.f32.mrb[0].mxu0
    %v1164 = vpop.f32.mrb[0].mxu0
    %v1165 = vadd.f32 0.0, %v1164
    %v1166 = vpop.f32.mrb[0].mxu0
    %1167 = vmatprep.mubr.bf16.mxu0 0
    %1168 = vmatmul.mubr.bf16.gmra.mrb[0].mxu0 %v186
    %v1169 = vpop.f32.mrb[0].mxu0
    %v1170 = vadd.f32 0.0, %v1169
    %v1171 = vpop.f32.mrb[0].mxu0
    %v1172 = vpop.f32.mrb[0].mxu0
    %v1173 = vadd.f32 0.0, %v1172
    %v1174 = vpop.f32.mrb[0].mxu0
    %1175 = vdwg.mxu0
    %v1176 = vpack.c.bf16 %v1116, %v1113
    %v1177 = vpack.c.bf16 %v1124, %v1121
    %v1178 = vpack.c.bf16 %v1165, %v1162
    %v1179 = vpack.c.bf16 %v1173, %v1170
    %v1184 = vunpack.c.l.b16 %v92
    %v1185 = vunpack.c.l.b16 %v93
    %v1186 = vunpack.c.l.b16 %v94
    %v1187 = vunpack.c.l.b16 %v95
    %v1188 = vpack.c.b16 %v1185, %v1184
    %v1189 = vpack.c.b16 %v1187, %v1186
    %v1193 = vsel %vm253, %v1177, 0
    %v1196 = vsel %vm253, %v1179, 0
    %1198 = vmatprep.subr.bf16.mxu0 0
    %1199 = vmatpush1.bf16.msra.mxu0 %v1188
    %1200 = vmatprep.subr.bf16.mxu0 0
    %1201 = vmatpush1.bf16.msra.mxu0 %v1189
    %1202 = vmatprep.subr.bf16.mxu0 0
    %1203 = vmatpush1.bf16.msra.mxu0 0
    %1204 = vmatprep.subr.bf16.mxu0 0
    %1205 = vmatpush1.bf16.msra.mxu0 0
    %1206 = vmatprep.subr.bf16.mxu0 0
    %1207 = vmatpush1.bf16.msra.mxu0 0
    %1208 = vmatprep.subr.bf16.mxu0 0
    %1209 = vmatpush1.bf16.msra.mxu0 0
    %1210 = vmatprep.subr.bf16.mxu0 0
    %1211 = vmatpush1.bf16.msra.mxu0 0
    %1212 = vmatprep.subr.bf16.mxu0 0
    %1213 = vmatpush1.bf16.msra.mxu0 0
    %1214 = vmatprep.subr.bf16.mxu0 0
    %1215 = vmatpush1.bf16.msra.mxu0 0
    %1216 = vmatprep.subr.bf16.mxu0 0
    %1217 = vmatpush1.bf16.msra.mxu0 0
    %1218 = vmatprep.subr.bf16.mxu0 0
    %1219 = vmatpush1.bf16.msra.mxu0 0
    %1220 = vmatprep.subr.bf16.mxu0 0
    %1221 = vmatpush1.bf16.msra.mxu0 0
    %1222 = vmatprep.subr.bf16.mxu0 0
    %1223 = vmatpush1.bf16.msra.mxu0 0
    %1224 = vmatprep.subr.bf16.mxu0 0
    %1225 = vmatpush1.bf16.msra.mxu0 0
    %1226 = vmatprep.subr.bf16.mxu0 0
    %1227 = vmatpush1.bf16.msra.mxu0 0
    %1228 = vmatprep.subr.bf16.mxu0 0
    %1229 = vmatpush1.bf16.msra.mxu0 0
    %1230 = vmatprep.mubr.bf16.mxu0 0
    %1231 = vmatmul.mubr.bf16.gmra.mrb[0].mxu0 %v1193
    %v1232 = vpop.f32.mrb[0].mxu0
    %v1233 = vadd.f32 0.0, %v1232
    %v1234 = vpop.f32.mrb[0].mxu0
    %v1235 = vpop.f32.mrb[0].mxu0
    %v1236 = vadd.f32 0.0, %v1235
    %v1237 = vpop.f32.mrb[0].mxu0
    %1238 = vmatprep.mubr.bf16.mxu0 0
    %1239 = vmatmul.mubr.bf16.gmra.mrb[0].mxu0 %v1196
    %v1240 = vpop.f32.mrb[0].mxu0
    %v1241 = vadd.f32 0.0, %v1240
    %v1242 = vpop.f32.mrb[0].mxu0
    %v1243 = vpop.f32.mrb[0].mxu0
    %v1244 = vadd.f32 0.0, %v1243
    %v1245 = vpop.f32.mrb[0].mxu0
    %1246 = vdwg.mxu0
    %v1251 = vunpack.c.l.b16 %v88
    %v1252 = vunpack.c.l.b16 %v89
    %v1253 = vunpack.c.l.b16 %v90
    %v1254 = vunpack.c.l.b16 %v91
    %v1255 = vpack.c.b16 %v1252, %v1251
    %v1256 = vpack.c.b16 %v1254, %v1253
    %v1260 = vsel %vm253, %v1176, 0
    %v1263 = vsel %vm253, %v1178, 0
    %1265 = vmatprep.subr.bf16.mxu0 0
    %1266 = vmatpush1.bf16.msra.mxu0 %v1255
    %1267 = vmatprep.subr.bf16.mxu0 0
    %1268 = vmatpush1.bf16.msra.mxu0 %v1256
    %1269 = vmatprep.subr.bf16.mxu0 0
    %1270 = vmatpush1.bf16.msra.mxu0 0
    %1271 = vmatprep.subr.bf16.mxu0 0
    %1272 = vmatpush1.bf16.msra.mxu0 0
    %1273 = vmatprep.subr.bf16.mxu0 0
    %1274 = vmatpush1.bf16.msra.mxu0 0
    %1275 = vmatprep.subr.bf16.mxu0 0
    %1276 = vmatpush1.bf16.msra.mxu0 0
    %1277 = vmatprep.subr.bf16.mxu0 0
    %1278 = vmatpush1.bf16.msra.mxu0 0
    %1279 = vmatprep.subr.bf16.mxu0 0
    %1280 = vmatpush1.bf16.msra.mxu0 0
    %1281 = vmatprep.subr.bf16.mxu0 0
    %1282 = vmatpush1.bf16.msra.mxu0 0
    %1283 = vmatprep.subr.bf16.mxu0 0
    %1284 = vmatpush1.bf16.msra.mxu0 0
    %1285 = vmatprep.subr.bf16.mxu0 0
    %1286 = vmatpush1.bf16.msra.mxu0 0
    %1287 = vmatprep.subr.bf16.mxu0 0
    %1288 = vmatpush1.bf16.msra.mxu0 0
    %1289 = vmatprep.subr.bf16.mxu0 0
    %1290 = vmatpush1.bf16.msra.mxu0 0
    %1291 = vmatprep.subr.bf16.mxu0 0
    %1292 = vmatpush1.bf16.msra.mxu0 0
    %1293 = vmatprep.subr.bf16.mxu0 0
    %1294 = vmatpush1.bf16.msra.mxu0 0
    %1295 = vmatprep.subr.bf16.mxu0 0
    %1296 = vmatpush1.bf16.msra.mxu0 0
    %1297 = vmatprep.mubr.bf16.mxu0 0
    %1298 = vmatmul.mubr.bf16.gmra.mrb[0].mxu0 %v1260
    %v1299 = vpop.f32.mrb[0].mxu0
    %v1300 = vadd.f32 %v1233, %v1299
    %v1301 = vpop.f32.mrb[0].mxu0
    %v1302 = vpop.f32.mrb[0].mxu0
    %v1303 = vadd.f32 %v1236, %v1302
    %v1304 = vpop.f32.mrb[0].mxu0
    %1305 = vmatprep.mubr.bf16.mxu0 0
    %1306 = vmatmul.mubr.bf16.gmra.mrb[0].mxu0 %v1263
    %v1307 = vpop.f32.mrb[0].mxu0
    %v1308 = vadd.f32 %v1241, %v1307
    %v1309 = vpop.f32.mrb[0].mxu0
    %v1310 = vpop.f32.mrb[0].mxu0
    %v1311 = vadd.f32 %v1244, %v1310
    %v1312 = vpop.f32.mrb[0].mxu0
    %1313 = vdwg.mxu0
    %v1315 = vlaneseq
    %v1316 = vshrl.u32 %v1315, 7
    %v1317 = vsub.s32 0, %v1316
    %v1318 = vrot.slane %v96, %v1317
    %v1320 = vadd.f32 %v1300, %v1318
    %v1321 = vadd.f32 %v1303, %v1318
    %v1322 = vadd.f32 %v1308, %v1318
    %v1323 = vadd.f32 %v1311, %v1318
    %1324 = vst [vmem:[#allocation7] sm:$0xff] %v1320
    %1325 = vst [vmem:[#allocation7 + $0x8] sm:$0xff] %v1321
    %1326 = vst [vmem:[#allocation7 + $0x10] sm:$0xff] %v1322
    %1327 = vst [vmem:[#allocation7 + $0x18] sm:$0xff] %v1323
    // Predicated region
    $region34: #{tpu_custom_call.1} parent=1 // pred_check
      _
    $region35: #{tpu_custom_call.1} parent=1 // pred_check_branch
      %1329 = sbr.rel (0) target = $region37
    $region36: #{tpu_custom_call.1} parent=1 // pred_region
      %s1331 = ssub.s32 512, 512
      %1332 = vsyncadd [#allocation4], %s1331
      %s1333 = sshll.u32 [#allocation7], 4
      %s1334 = int_to_ptr.vmem [resolvable:$true] %s1333
      %1339 = dma.vmem_to_hbm [thread:$0]  %s1334, 512, %s6, [#allocation4], 128, 128, 8
    $region37: #{tpu_custom_call.1} parent=1 // pred_fallthru
      _
    // Predicated region
    $region38: #{tpu_custom_call.1} parent=1 // pred_check
      _
    $region39: #{tpu_custom_call.1} parent=1 // pred_check_branch
      %1341 = sbr.rel (0) target = $region41
    $region40: #{tpu_custom_call.1} parent=1 // pred_region
      %1342 = dma.done [#allocation4], 512
    $region41: #{tpu_custom_call.1} parent=1 // pred_fallthru
      _
    %1343 = vsyncpa [#allocation3], 1
    %1344 = vsyncpa [#allocation6], 1
    %1345 = vsyncpa [#allocation4], 1

</llo_original>
